<compile_context>
chip_gen: v7x
topology: tpu7x:2x2x1
jax: 0.10.0
libtpu: 0.0.40
codegen_flags: <defaults>
</compile_context>

<pallas_src>
import functools

import jax
import jax.numpy as jnp
from jax import lax
from jax.experimental import pallas as pl
from jax.experimental.pallas import tpu as pltpu


# ----------------------------------------------------------------------------
# Fused 2-layer LSTM kernels (input projection hoisted, recurrence in VMEM)
# ----------------------------------------------------------------------------

def _lstm_cell(gates, c, H):
    """Gate columns pre-ordered (i, f, o, g): sigmoid over [:3H], tanh over [3H:]."""
    sig = jax.nn.sigmoid(gates[:, :3 * H])
    g = jnp.tanh(gates[:, 3 * H:])
    c_new = sig[:, H:2 * H] * c + sig[:, :H] * g
    h_new = sig[:, 2 * H:3 * H] * jnp.tanh(c_new)
    return h_new, c_new


def _lstm2_recurrence(xp_ref, whh0_ref, wih1_ref, whh1_ref, b1_ref, emit):
    """Shared fused 2-layer recurrence.  xp_ref = precomputed x@W_ih0 + b0, (T,B,4H).
    Calls emit(t, h1_t) each step, returns the final layer-1 hidden state."""
    T = xp_ref.shape[0]
    B = xp_ref.shape[1]
    H = whh0_ref.shape[0]

    def step(t, carry):
        h0, c0, h1, c1 = carry
        g0 = xp_ref[t] + jnp.dot(h0.astype(jnp.bfloat16), whh0_ref[...],
                                 preferred_element_type=jnp.float32)
        h0, c0 = _lstm_cell(g0, c0, H)
        # TODO(synk): inter-layer LSTM dropout treated as identity (deterministic).
        g1 = (b1_ref[...]
              + jnp.dot(h0.astype(jnp.bfloat16), wih1_ref[...],
                        preferred_element_type=jnp.float32)
              + jnp.dot(h1.astype(jnp.bfloat16), whh1_ref[...],
                        preferred_element_type=jnp.float32))
        h1, c1 = _lstm_cell(g1, c1, H)
        emit(t, h1)
        return h0, c0, h1, c1

    z = jnp.zeros((B, H), jnp.float32)
    _, _, h1, _ = lax.fori_loop(0, T, step, (z, z, z, z), unroll=True)
    return h1


def dec_lstm2_kernel(xp_ref, whh0_ref, wih1_ref, whh1_ref, b1_ref, out_ref):
    """Decoder: emit the full layer-1 hidden sequence (T, B, H)."""
    def emit(t, h1):
        out_ref[t] = h1
    _lstm2_recurrence(xp_ref, whh0_ref, wih1_ref, whh1_ref, b1_ref, emit)


def enc_lstm2_kernel(xp_ref, whh0_ref, wih1_ref, whh1_ref, b1_ref,
                     lw_ref, lb_ref, out_ref):
    """Encoder: only the last hidden state, with the SAREncoder Linear fused in."""
    h_last = _lstm2_recurrence(xp_ref, whh0_ref, wih1_ref, whh1_ref, b1_ref,
                               lambda t, h: None)
    out_ref[...] = (jnp.dot(h_last.astype(jnp.bfloat16), lw_ref[...],
                            preferred_element_type=jnp.float32) + lb_ref[...])


def _input_proj(x_btc, wih0_bf16, b0_f32):
    """Hoisted layer-0 input projection: one (B,T,In)@(In,4H) matmul, time-major out."""
    xp = jnp.dot(x_btc.astype(jnp.bfloat16), wih0_bf16,
                 preferred_element_type=jnp.float32) + b0_f32       # (B, T, 4H)
    return jnp.transpose(xp, (1, 0, 2))                              # (T, B, 4H)


def lstm2_decoder_seq(x_btc, wp):
    B, T, _ = x_btc.shape
    H = wp['whh0'].shape[0]
    xp = _input_proj(x_btc, wp['wih0'], wp['b0'])
    out_tm = pl.pallas_call(
        dec_lstm2_kernel,
        out_shape=jax.ShapeDtypeStruct((T, B, H), jnp.float32),
    )(xp, wp['whh0'], wp['wih1'], wp['whh1'], wp['b1'])
    return jnp.transpose(out_tm, (1, 0, 2))                          # (B, T, H)


def lstm2_encoder_holistic(x_btc, wp, lw_bf16, lb_f32):
    B, T, _ = x_btc.shape
    H = wp['whh0'].shape[0]
    xp = _input_proj(x_btc, wp['wih0'], wp['b0'])
    return pl.pallas_call(
        enc_lstm2_kernel,
        out_shape=jax.ShapeDtypeStruct((B, H), jnp.float32),
    )(xp, wp['whh0'], wp['wih1'], wp['whh1'], wp['b1'], lw_bf16, lb_f32)


# ----------------------------------------------------------------------------
# 3x3 conv: 9 shifted-accumulate matmuls in one kernel (no im2col materialization)
# ----------------------------------------------------------------------------

def conv3x3_kernel(H, W, xp_ref, w_ref, b_ref, o_ref):
    # xp: (B, H+2, W+2, C) f32, w: (9, C, D) bf16, b: (1, D) f32 -> o: (B*H*W, D) f32
    B = xp_ref.shape[0]
    C = xp_ref.shape[3]
    D = w_ref.shape[2]
    xv = xp_ref[...]
    acc = jnp.zeros((B * H * W, D), jnp.float32)
    for k in range(9):
        kh, kw = k // 3, k % 3
        patch = xv[:, kh:kh + H, kw:kw + W, :].reshape(B * H * W, C)
        acc = acc + jnp.dot(patch.astype(jnp.bfloat16), w_ref[k],
                            preferred_element_type=jnp.float32)
    o_ref[...] = acc + b_ref[...]


def conv3x3_same(feat_nhwc, w9_bf16, b_f32):
    B, H, W, C = feat_nhwc.shape
    D = w9_bf16.shape[2]
    xp = jnp.pad(feat_nhwc, ((0, 0), (1, 1), (1, 1), (0, 0)))
    out = pl.pallas_call(
        functools.partial(conv3x3_kernel, H, W),
        out_shape=jax.ShapeDtypeStruct((B * H * W, D), jnp.float32),
    )(xp, w9_bf16, b_f32)
    return out.reshape(B, H * W, D)


# ----------------------------------------------------------------------------
# Fused 2D attention + prediction head (vectorized over T, grid over batch)
# ----------------------------------------------------------------------------

def attn_pred_kernel(W, vw_ref, hid_ref, key_ref, feat_ref, hol_ref,
                     w1_ref, b1_ref, w2_ref, b2_ref,
                     wh_ref, wa_ref, wc_ref, bp_ref, out_ref):
    b = pl.program_id(0)
    vw = vw_ref[b]                                    # scalar valid width (SMEM)

    hid = hid_ref[0]                                  # (T, C)
    key = key_ref[0]                                  # (HW, C)
    feat = feat_ref[0]                                # (HW, C)
    HW = key.shape[0]

    # attention query (conv1x1_1), fused
    q = (jnp.dot(hid.astype(jnp.bfloat16), w1_ref[...],
                 preferred_element_type=jnp.float32) + b1_ref[...])          # (T, C)

    # additive attention energies for all T at once, scores with HW on the lane axis
    e = jnp.tanh(key[None, :, :] + q[:, None, :])                            # (T, HW, C)
    scores = jnp.sum(e * w2_ref[...][None, :, :], axis=-1) + b2_ref[...]     # (T, HW)

    # width mask from the scalar-prefetched valid_width (col index built via iota)
    hw_idx = lax.broadcasted_iota(jnp.int32, (1, HW), 1)
    col = hw_idx - (hw_idx // W) * W
    scores = jnp.where(col >= vw, jnp.float32(-1e30), scores)

    # softmax along the spatial (lane) axis
    m = jnp.max(scores, axis=-1, keepdims=True)
    p = jnp.exp(scores - m)
    wgt = p / jnp.sum(p, axis=-1, keepdims=True)                             # (T, HW)

    # attention-weighted spatial sum: one (T,HW)@(HW,C) MXU matmul
    attn = jnp.dot(wgt.astype(jnp.bfloat16), feat.astype(jnp.bfloat16),
                   preferred_element_type=jnp.float32)                       # (T, C)

    # fused prediction head on [hidden, attn, holistic]; lane-dense padded N
    preds = (jnp.dot(hid.astype(jnp.bfloat16), wh_ref[...],
                     preferred_element_type=jnp.float32)
             + jnp.dot(attn.astype(jnp.bfloat16), wa_ref[...],
                       preferred_element_type=jnp.float32)
             + jnp.dot(hol_ref[0].astype(jnp.bfloat16), wc_ref[...],
                       preferred_element_type=jnp.float32)
             + bp_ref[...])                                                  # (T, NP)
    out_ref[0] = preds


def attention_pred(valid_width, hidden, key2, feat2, holistic, prm, W, num_classes):
    B, T, C = hidden.shape
    HW = key2.shape[1]
    NP = prm['wh'].shape[1]
    grid_spec = pltpu.PrefetchScalarGridSpec(
        num_scalar_prefetch=1,
        grid=(B,),
        in_specs=[
            pl.BlockSpec((1, T, C), lambda b, vw: (b, 0, 0)),    # hidden
            pl.BlockSpec((1, HW, C), lambda b, vw: (b, 0, 0)),   # key (conv3x3)
            pl.BlockSpec((1, HW, C), lambda b, vw: (b, 0, 0)),   # feat (values)
            pl.BlockSpec((1, 1, C), lambda b, vw: (b, 0, 0)),    # holistic
            pl.BlockSpec((C, C), lambda b, vw: (0, 0)),          # w1 (conv1x1_1)
            pl.BlockSpec((1, C), lambda b, vw: (0, 0)),          # b1
            pl.BlockSpec((1, C), lambda b, vw: (0, 0)),          # w2 (conv1x1_2)
            pl.BlockSpec((1, 1), lambda b, vw: (0, 0)),          # b2
            pl.BlockSpec((C, NP), lambda b, vw: (0, 0)),         # pred W (hidden part)
            pl.BlockSpec((C, NP), lambda b, vw: (0, 0)),         # pred W (attn part)
            pl.BlockSpec((C, NP), lambda b, vw: (0, 0)),         # pred W (holistic part)
            pl.BlockSpec((1, NP), lambda b, vw: (0, 0)),         # pred bias (padded)
        ],
        out_specs=pl.BlockSpec((1, T, NP), lambda b, vw: (b, 0, 0)),
    )
    preds_pad = pl.pallas_call(
        functools.partial(attn_pred_kernel, W),
        out_shape=jax.ShapeDtypeStruct((B, T, NP), jnp.float32),
        grid_spec=grid_spec,
        compiler_params=pltpu.CompilerParams(dimension_semantics=("parallel",)),
    )(valid_width, hidden, key2, feat2, holistic.reshape(B, 1, C),
      prm['w1'], prm['b1'], prm['w2'], prm['b2'],
      prm['wh'], prm['wa'], prm['wc'], prm['bp'])
    return preds_pad[:, :, :num_classes]


# ----------------------------------------------------------------------------
# Parameter preparation (gate reorder, transposes, bf16 casts, lane padding)
# ----------------------------------------------------------------------------

def prepare_params(p, num_classes):
    C = p['enc_lin_w'].shape[0]
    NP = ((num_classes + 127) // 128) * 128

    def prep_lstm(prefix):
        out = {}
        for l, names in ((0, ('wih0', 'whh0', 'b0')), (1, ('wih1', 'whh1', 'b1'))):
            w_ih = p[f'{prefix}_wih{l}']
            w_hh = p[f'{prefix}_whh{l}']
            bias = p[f'{prefix}_bih{l}'] + p[f'{prefix}_bhh{l}']
            H = w_hh.shape[1]
            # torch gate order (i,f,g,o) -> (i,f,o,g) so sigmoid/tanh are 2 contiguous slices
            reord = lambda a: jnp.concatenate([a[:2 * H], a[3 * H:], a[2 * H:3 * H]], axis=0)
            out[names[0]] = reord(w_ih).T.astype(jnp.bfloat16)          # (In, 4H)
            out[names[1]] = reord(w_hh).T.astype(jnp.bfloat16)          # (H, 4H)
            out[names[2]] = reord(bias).reshape(1, 4 * H).astype(jnp.float32)
        return out

    wt = p['pred_w'].T.astype(jnp.float32)                              # (3C, num_classes)
    pad_n = lambda a: jnp.pad(a, ((0, 0), (0, NP - num_classes)))
    return {
        'enc_lstm': prep_lstm('enc'),
        'dec_lstm': prep_lstm('dec'),
        'enc_lw': p['enc_lin_w'].T.astype(jnp.bfloat16),
        'enc_lb': p['enc_lin_b'].reshape(1, C).astype(jnp.float32),
        'c33_w9': jnp.transpose(p['c33_w'], (2, 3, 1, 0)).reshape(9, C, C).astype(jnp.bfloat16),
        'c33_b': p['c33_b'].reshape(1, C).astype(jnp.float32),
        'emb': p['emb'].astype(jnp.float32),
        'attn': {
            'w1': p['c11_1_w'].T.astype(jnp.bfloat16),
            'b1': p['c11_1_b'].reshape(1, C).astype(jnp.float32),
            'w2': p['c11_2_w'].reshape(1, C).astype(jnp.float32),
            'b2': p['c11_2_b'].reshape(1, 1).astype(jnp.float32),
            'wh': pad_n(wt[:C]).astype(jnp.bfloat16),
            'wa': pad_n(wt[C:2 * C]).astype(jnp.bfloat16),
            'wc': pad_n(wt[2 * C:]).astype(jnp.bfloat16),
            'bp': pad_n(p['pred_b'].reshape(1, num_classes)).astype(jnp.float32),
        },
    }


# ----------------------------------------------------------------------------
# Forward (SARDecoder.forward_train with pred_concat=True, mask=True, use_lstm=True)
# ----------------------------------------------------------------------------

def sar_decoder_forward(feat_nchw, labels, max_len, valid_ratios, q, num_classes):
    B, C, H, W = feat_nchw.shape

    # --- SAREncoder: max-pool over H, fused 2-layer LSTM + final Linear ---
    feat_v = jnp.transpose(jnp.max(feat_nchw, axis=2), (0, 2, 1))        # (B, W, C)
    holistic = lstm2_encoder_holistic(feat_v, q['enc_lstm'], q['enc_lw'], q['enc_lb'])

    # --- token sequence ---
    label = labels[:, :1 + max_len]
    tokens = jnp.concatenate(
        [holistic[:, None, :], jnp.take(q['emb'], label, axis=0)], axis=1)   # (B, T, C)

    # --- decoder 2-layer LSTM (fused, VMEM-resident recurrence) ---
    hidden = lstm2_decoder_seq(tokens, q['dec_lstm'])                    # (B, T, C)

    # --- attention key (3x3 conv) and values ---
    feat_nhwc = jnp.transpose(feat_nchw, (0, 2, 3, 1)).astype(jnp.float32)
    key2 = conv3x3_same(feat_nhwc, q['c33_w9'], q['c33_b'])              # (B, HW, C)
    feat2 = feat_nhwc.reshape(B, H * W, C)

    # valid width per batch (clamped to >=1 to keep the masked softmax finite)
    valid_width = jnp.clip(
        jnp.ceil(jnp.float32(W) * valid_ratios).astype(jnp.int32), 1, W)

    # --- fused attention + prediction head (pred_concat=True) ---
    preds = attention_pred(valid_width, hidden, key2, feat2, holistic,
                           q['attn'], W, num_classes)                    # (B, T, nc)
    # TODO(synk): pred_dropout is identity here (stochastic in torch train mode).
    return preds[:, 1:, :]


# ----------------------------------------------------------------------------
# Deterministic parameter init (shapes follow the torch module __init__)
# ----------------------------------------------------------------------------

def init_params(key, C, num_classes):
    keys = iter(jax.random.split(key, 64))

    def nrm(shape, scale=0.08):
        return jax.random.normal(next(keys), shape, jnp.float32) * scale

    p = {}
    for l in (0, 1):                                  # encoder 2-layer LSTM
        p[f'enc_wih{l}'] = nrm((4 * C, C))
        p[f'enc_whh{l}'] = nrm((4 * C, C))
        p[f'enc_bih{l}'] = nrm((4 * C,))
        p[f'enc_bhh{l}'] = nrm((4 * C,))
    p['enc_lin_w'] = nrm((C, C))
    p['enc_lin_b'] = nrm((C,))
    p['c11_1_w'] = nrm((C, C))
    p['c11_1_b'] = nrm((C,))
    p['c33_w'] = nrm((C, C, 3, 3))
    p['c33_b'] = nrm((C,))
    p['c11_2_w'] = nrm((1, C))
    p['c11_2_b'] = nrm((1,))
    emb = nrm((num_classes, C))                       # padding_idx row zeroed
    p['emb'] = emb.at[num_classes - 1].set(0.0)
    for l in (0, 1):                                  # decoder 2-layer LSTM
        p[f'dec_wih{l}'] = nrm((4 * C, C))
        p[f'dec_whh{l}'] = nrm((4 * C, C))
        p[f'dec_bih{l}'] = nrm((4 * C,))
        p[f'dec_bhh{l}'] = nrm((4 * C,))
    p['pred_w'] = nrm((num_classes, 3 * C))           # in_ch + in_ch + dec_dim = 3C
    p['pred_b'] = nrm((num_classes,))
    return p


# ----------------------------------------------------------------------------
# Main
# ----------------------------------------------------------------------------

if __name__ == "__main__":
    C = 32                    # in_channels
    num_classes = 11          # out_channels
    B, H, W = 2, 4, 8
    max_len_param = 5         # module max_len

    key = jax.random.PRNGKey(0)
    kp, kf, kl = jax.random.split(key, 3)

    raw_params = init_params(kp, C, num_classes)
    params = prepare_params(raw_params, num_classes)

    feat = jax.random.normal(kf, (B, C, H, W), jnp.float32)            # NCHW, like torch
    labels = jax.random.randint(kl, (B, max_len_param + 1), 0, num_classes, dtype=jnp.int32)
    lengths = jnp.array([4, 3], dtype=jnp.int32)                        # data[1]
    valid_ratios = jnp.array([1.0, 0.6], dtype=jnp.float32)             # data[-1]

    # data[1].max() resolved on the host once; would be a static/padded length
    # in a jitted training step (avoids tracing through a host sync).
    max_len = int(lengths.max())

    preds = sar_decoder_forward(feat, labels, max_len, valid_ratios, params, num_classes)
    preds = jax.block_until_ready(preds)

    expected_T = 1 + max_len                 # sequence length after dropping first step
    assert preds.shape == (B, expected_T, num_classes), preds.shape
    assert bool(jnp.all(jnp.isfinite(preds)))
    print("KERNEL_OK")
</pallas_src>

<mosaic_0001>
module attributes {stable_mosaic.version = 11 : i64} {
  func.func @enc_lstm2_kernel(%arg0: memref<8x2x128xf32, #tpu.memory_space<vmem>>, %arg1: memref<32x128xbf16, #tpu.memory_space<vmem>>, %arg2: memref<32x128xbf16, #tpu.memory_space<vmem>>, %arg3: memref<32x128xbf16, #tpu.memory_space<vmem>>, %arg4: memref<1x128xf32, #tpu.memory_space<vmem>>, %arg5: memref<32x32xbf16, #tpu.memory_space<vmem>>, %arg6: memref<1x32xf32, #tpu.memory_space<vmem>>, %arg7: memref<2x32xf32, #tpu.memory_space<vmem>>) attributes {dimension_semantics = [], scalar_prefetch = 0 : i64, scratch_operands = 0 : i64, tpu.core_type = #tpu.core_type<tc>} {
    %cst = arith.constant 0.000000e+00 : f32
    %0 = vector.broadcast %cst : f32 to vector<2x32xf32>
    %c0_i32 = arith.constant 0 : i32
    %1 = arith.index_cast %c0_i32 : i32 to index
    %c0 = arith.constant 0 : index
    %c0_0 = arith.constant 0 : index
    %2 = vector.load %arg0[%1, %c0, %c0_0] : memref<8x2x128xf32, #tpu.memory_space<vmem>>, vector<1x2x128xf32>
    %3 = vector.shape_cast %2 : vector<1x2x128xf32> to vector<2x128xf32>
    %4 = arith.truncf %0 : vector<2x32xf32> to vector<2x32xbf16>
    %c0_1 = arith.constant 0 : index
    %c0_2 = arith.constant 0 : index
    %5 = vector.load %arg1[%c0_1, %c0_2] : memref<32x128xbf16, #tpu.memory_space<vmem>>, vector<32x128xbf16>
    %cst_3 = arith.constant dense<0.000000e+00> : vector<2x128xf32>
    %6 = tpu.matmul %4, %5, %cst_3 {dimension_numbers = #tpu.dot_dimension_numbers<[1], [0], [0], [1], [0, 0, 1, 1], [], []>} : vector<2x32xbf16>, vector<32x128xbf16>, vector<2x128xf32> -> vector<2x128xf32>
    %7 = arith.addf %3, %6 : vector<2x128xf32>
    %8 = vector.extract_strided_slice %7 {offsets = [0, 0], sizes = [2, 96], strides = [1, 1]} : vector<2x128xf32> to vector<2x96xf32>
    %9 = arith.negf %8 : vector<2x96xf32>
    %10 = math.exp %9 : vector<2x96xf32>
    %cst_4 = arith.constant 1.000000e+00 : f32
    %11 = vector.broadcast %cst_4 : f32 to vector<2x96xf32>
    %12 = arith.addf %11, %10 : vector<2x96xf32>
    %13 = arith.divf %11, %12 : vector<2x96xf32>
    %14 = vector.extract_strided_slice %7 {offsets = [0, 96], sizes = [2, 32], strides = [1, 1]} : vector<2x128xf32> to vector<2x32xf32>
    %15 = math.tanh %14 : vector<2x32xf32>
    %16 = vector.extract_strided_slice %13 {offsets = [0, 32], sizes = [2, 32], strides = [1, 1]} : vector<2x96xf32> to vector<2x32xf32>
    %17 = arith.mulf %16, %0 : vector<2x32xf32>
    %18 = vector.extract_strided_slice %13 {offsets = [0, 0], sizes = [2, 32], strides = [1, 1]} : vector<2x96xf32> to vector<2x32xf32>
    %19 = arith.mulf %18, %15 : vector<2x32xf32>
    %20 = arith.addf %17, %19 : vector<2x32xf32>
    %21 = vector.extract_strided_slice %13 {offsets = [0, 64], sizes = [2, 32], strides = [1, 1]} : vector<2x96xf32> to vector<2x32xf32>
    %22 = math.tanh %20 : vector<2x32xf32>
    %23 = arith.mulf %21, %22 : vector<2x32xf32>
    %c0_5 = arith.constant 0 : index
    %c0_6 = arith.constant 0 : index
    %24 = vector.load %arg4[%c0_5, %c0_6] : memref<1x128xf32, #tpu.memory_space<vmem>>, vector<1x128xf32>
    %25 = arith.truncf %23 : vector<2x32xf32> to vector<2x32xbf16>
    %c0_7 = arith.constant 0 : index
    %c0_8 = arith.constant 0 : index
    %26 = vector.load %arg2[%c0_7, %c0_8] : memref<32x128xbf16, #tpu.memory_space<vmem>>, vector<32x128xbf16>
    %cst_9 = arith.constant dense<0.000000e+00> : vector<2x128xf32>
    %27 = tpu.matmul %25, %26, %cst_9 {dimension_numbers = #tpu.dot_dimension_numbers<[1], [0], [0], [1], [0, 0, 1, 1], [], []>} : vector<2x32xbf16>, vector<32x128xbf16>, vector<2x128xf32> -> vector<2x128xf32>
    %28 = vector.broadcast %24 : vector<1x128xf32> to vector<2x128xf32>
    %29 = arith.addf %28, %27 : vector<2x128xf32>
    %30 = arith.truncf %0 : vector<2x32xf32> to vector<2x32xbf16>
    %c0_10 = arith.constant 0 : index
    %c0_11 = arith.constant 0 : index
    %31 = vector.load %arg3[%c0_10, %c0_11] : memref<32x128xbf16, #tpu.memory_space<vmem>>, vector<32x128xbf16>
    %cst_12 = arith.constant dense<0.000000e+00> : vector<2x128xf32>
    %32 = tpu.matmul %30, %31, %cst_12 {dimension_numbers = #tpu.dot_dimension_numbers<[1], [0], [0], [1], [0, 0, 1, 1], [], []>} : vector<2x32xbf16>, vector<32x128xbf16>, vector<2x128xf32> -> vector<2x128xf32>
    %33 = arith.addf %29, %32 : vector<2x128xf32>
    %34 = vector.extract_strided_slice %33 {offsets = [0, 0], sizes = [2, 96], strides = [1, 1]} : vector<2x128xf32> to vector<2x96xf32>
    %35 = arith.negf %34 : vector<2x96xf32>
    %36 = math.exp %35 : vector<2x96xf32>
    %cst_13 = arith.constant 1.000000e+00 : f32
    %37 = vector.broadcast %cst_13 : f32 to vector<2x96xf32>
    %38 = arith.addf %37, %36 : vector<2x96xf32>
    %39 = arith.divf %37, %38 : vector<2x96xf32>
    %40 = vector.extract_strided_slice %33 {offsets = [0, 96], sizes = [2, 32], strides = [1, 1]} : vector<2x128xf32> to vector<2x32xf32>
    %41 = math.tanh %40 : vector<2x32xf32>
    %42 = vector.extract_strided_slice %39 {offsets = [0, 32], sizes = [2, 32], strides = [1, 1]} : vector<2x96xf32> to vector<2x32xf32>
    %43 = arith.mulf %42, %0 : vector<2x32xf32>
    %44 = vector.extract_strided_slice %39 {offsets = [0, 0], sizes = [2, 32], strides = [1, 1]} : vector<2x96xf32> to vector<2x32xf32>
    %45 = arith.mulf %44, %41 : vector<2x32xf32>
    %46 = arith.addf %43, %45 : vector<2x32xf32>
    %47 = vector.extract_strided_slice %39 {offsets = [0, 64], sizes = [2, 32], strides = [1, 1]} : vector<2x96xf32> to vector<2x32xf32>
    %48 = math.tanh %46 : vector<2x32xf32>
    %49 = arith.mulf %47, %48 : vector<2x32xf32>
    %c1_i32 = arith.constant 1 : i32
    %50 = arith.index_cast %c1_i32 : i32 to index
    %c0_14 = arith.constant 0 : index
    %c0_15 = arith.constant 0 : index
    %51 = vector.load %arg0[%50, %c0_14, %c0_15] : memref<8x2x128xf32, #tpu.memory_space<vmem>>, vector<1x2x128xf32>
    %52 = vector.shape_cast %51 : vector<1x2x128xf32> to vector<2x128xf32>
    %53 = arith.truncf %23 : vector<2x32xf32> to vector<2x32xbf16>
    %c0_16 = arith.constant 0 : index
    %c0_17 = arith.constant 0 : index
    %54 = vector.load %arg1[%c0_16, %c0_17] : memref<32x128xbf16, #tpu.memory_space<vmem>>, vector<32x128xbf16>
    %cst_18 = arith.constant dense<0.000000e+00> : vector<2x128xf32>
    %55 = tpu.matmul %53, %54, %cst_18 {dimension_numbers = #tpu.dot_dimension_numbers<[1], [0], [0], [1], [0, 0, 1, 1], [], []>} : vector<2x32xbf16>, vector<32x128xbf16>, vector<2x128xf32> -> vector<2x128xf32>
    %56 = arith.addf %52, %55 : vector<2x128xf32>
    %57 = vector.extract_strided_slice %56 {offsets = [0, 0], sizes = [2, 96], strides = [1, 1]} : vector<2x128xf32> to vector<2x96xf32>
    %58 = arith.negf %57 : vector<2x96xf32>
    %59 = math.exp %58 : vector<2x96xf32>
    %cst_19 = arith.constant 1.000000e+00 : f32
    %60 = vector.broadcast %cst_19 : f32 to vector<2x96xf32>
    %61 = arith.addf %60, %59 : vector<2x96xf32>
    %62 = arith.divf %60, %61 : vector<2x96xf32>
    %63 = vector.extract_strided_slice %56 {offsets = [0, 96], sizes = [2, 32], strides = [1, 1]} : vector<2x128xf32> to vector<2x32xf32>
    %64 = math.tanh %63 : vector<2x32xf32>
    %65 = vector.extract_strided_slice %62 {offsets = [0, 32], sizes = [2, 32], strides = [1, 1]} : vector<2x96xf32> to vector<2x32xf32>
    %66 = arith.mulf %65, %20 : vector<2x32xf32>
    %67 = vector.extract_strided_slice %62 {offsets = [0, 0], sizes = [2, 32], strides = [1, 1]} : vector<2x96xf32> to vector<2x32xf32>
    %68 = arith.mulf %67, %64 : vector<2x32xf32>
    %69 = arith.addf %66, %68 : vector<2x32xf32>
    %70 = vector.extract_strided_slice %62 {offsets = [0, 64], sizes = [2, 32], strides = [1, 1]} : vector<2x96xf32> to vector<2x32xf32>
    %71 = math.tanh %69 : vector<2x32xf32>
    %72 = arith.mulf %70, %71 : vector<2x32xf32>
    %c0_20 = arith.constant 0 : index
    %c0_21 = arith.constant 0 : index
    %73 = vector.load %arg4[%c0_20, %c0_21] : memref<1x128xf32, #tpu.memory_space<vmem>>, vector<1x128xf32>
    %74 = arith.truncf %72 : vector<2x32xf32> to vector<2x32xbf16>
    %c0_22 = arith.constant 0 : index
    %c0_23 = arith.constant 0 : index
    %75 = vector.load %arg2[%c0_22, %c0_23] : memref<32x128xbf16, #tpu.memory_space<vmem>>, vector<32x128xbf16>
    %cst_24 = arith.constant dense<0.000000e+00> : vector<2x128xf32>
    %76 = tpu.matmul %74, %75, %cst_24 {dimension_numbers = #tpu.dot_dimension_numbers<[1], [0], [0], [1], [0, 0, 1, 1], [], []>} : vector<2x32xbf16>, vector<32x128xbf16>, vector<2x128xf32> -> vector<2x128xf32>
    %77 = vector.broadcast %73 : vector<1x128xf32> to vector<2x128xf32>
    %78 = arith.addf %77, %76 : vector<2x128xf32>
    %79 = arith.truncf %49 : vector<2x32xf32> to vector<2x32xbf16>
    %c0_25 = arith.constant 0 : index
    %c0_26 = arith.constant 0 : index
    %80 = vector.load %arg3[%c0_25, %c0_26] : memref<32x128xbf16, #tpu.memory_space<vmem>>, vector<32x128xbf16>
    %cst_27 = arith.constant dense<0.000000e+00> : vector<2x128xf32>
    %81 = tpu.matmul %79, %80, %cst_27 {dimension_numbers = #tpu.dot_dimension_numbers<[1], [0], [0], [1], [0, 0, 1, 1], [], []>} : vector<2x32xbf16>, vector<32x128xbf16>, vector<2x128xf32> -> vector<2x128xf32>
    %82 = arith.addf %78, %81 : vector<2x128xf32>
    %83 = vector.extract_strided_slice %82 {offsets = [0, 0], sizes = [2, 96], strides = [1, 1]} : vector<2x128xf32> to vector<2x96xf32>
    %84 = arith.negf %83 : vector<2x96xf32>
    %85 = math.exp %84 : vector<2x96xf32>
    %cst_28 = arith.constant 1.000000e+00 : f32
    %86 = vector.broadcast %cst_28 : f32 to vector<2x96xf32>
    %87 = arith.addf %86, %85 : vector<2x96xf32>
    %88 = arith.divf %86, %87 : vector<2x96xf32>
    %89 = vector.extract_strided_slice %82 {offsets = [0, 96], sizes = [2, 32], strides = [1, 1]} : vector<2x128xf32> to vector<2x32xf32>
    %90 = math.tanh %89 : vector<2x32xf32>
    %91 = vector.extract_strided_slice %88 {offsets = [0, 32], sizes = [2, 32], strides = [1, 1]} : vector<2x96xf32> to vector<2x32xf32>
    %92 = arith.mulf %91, %46 : vector<2x32xf32>
    %93 = vector.extract_strided_slice %88 {offsets = [0, 0], sizes = [2, 32], strides = [1, 1]} : vector<2x96xf32> to vector<2x32xf32>
    %94 = arith.mulf %93, %90 : vector<2x32xf32>
    %95 = arith.addf %92, %94 : vector<2x32xf32>
    %96 = vector.extract_strided_slice %88 {offsets = [0, 64], sizes = [2, 32], strides = [1, 1]} : vector<2x96xf32> to vector<2x32xf32>
    %97 = math.tanh %95 : vector<2x32xf32>
    %98 = arith.mulf %96, %97 : vector<2x32xf32>
    %c2_i32 = arith.constant 2 : i32
    %99 = arith.index_cast %c2_i32 : i32 to index
    %c0_29 = arith.constant 0 : index
    %c0_30 = arith.constant 0 : index
    %100 = vector.load %arg0[%99, %c0_29, %c0_30] : memref<8x2x128xf32, #tpu.memory_space<vmem>>, vector<1x2x128xf32>
    %101 = vector.shape_cast %100 : vector<1x2x128xf32> to vector<2x128xf32>
    %102 = arith.truncf %72 : vector<2x32xf32> to vector<2x32xbf16>
    %c0_31 = arith.constant 0 : index
    %c0_32 = arith.constant 0 : index
    %103 = vector.load %arg1[%c0_31, %c0_32] : memref<32x128xbf16, #tpu.memory_space<vmem>>, vector<32x128xbf16>
    %cst_33 = arith.constant dense<0.000000e+00> : vector<2x128xf32>
    %104 = tpu.matmul %102, %103, %cst_33 {dimension_numbers = #tpu.dot_dimension_numbers<[1], [0], [0], [1], [0, 0, 1, 1], [], []>} : vector<2x32xbf16>, vector<32x128xbf16>, vector<2x128xf32> -> vector<2x128xf32>
    %105 = arith.addf %101, %104 : vector<2x128xf32>
    %106 = vector.extract_strided_slice %105 {offsets = [0, 0], sizes = [2, 96], strides = [1, 1]} : vector<2x128xf32> to vector<2x96xf32>
    %107 = arith.negf %106 : vector<2x96xf32>
    %108 = math.exp %107 : vector<2x96xf32>
    %cst_34 = arith.constant 1.000000e+00 : f32
    %109 = vector.broadcast %cst_34 : f32 to vector<2x96xf32>
    %110 = arith.addf %109, %108 : vector<2x96xf32>
    %111 = arith.divf %109, %110 : vector<2x96xf32>
    %112 = vector.extract_strided_slice %105 {offsets = [0, 96], sizes = [2, 32], strides = [1, 1]} : vector<2x128xf32> to vector<2x32xf32>
    %113 = math.tanh %112 : vector<2x32xf32>
    %114 = vector.extract_strided_slice %111 {offsets = [0, 32], sizes = [2, 32], strides = [1, 1]} : vector<2x96xf32> to vector<2x32xf32>
    %115 = arith.mulf %114, %69 : vector<2x32xf32>
    %116 = vector.extract_strided_slice %111 {offsets = [0, 0], sizes = [2, 32], strides = [1, 1]} : vector<2x96xf32> to vector<2x32xf32>
    %117 = arith.mulf %116, %113 : vector<2x32xf32>
    %118 = arith.addf %115, %117 : vector<2x32xf32>
    %119 = vector.extract_strided_slice %111 {offsets = [0, 64], sizes = [2, 32], strides = [1, 1]} : vector<2x96xf32> to vector<2x32xf32>
    %120 = math.tanh %118 : vector<2x32xf32>
    %121 = arith.mulf %119, %120 : vector<2x32xf32>
    %c0_35 = arith.constant 0 : index
    %c0_36 = arith.constant 0 : index
    %122 = vector.load %arg4[%c0_35, %c0_36] : memref<1x128xf32, #tpu.memory_space<vmem>>, vector<1x128xf32>
    %123 = arith.truncf %121 : vector<2x32xf32> to vector<2x32xbf16>
    %c0_37 = arith.constant 0 : index
    %c0_38 = arith.constant 0 : index
    %124 = vector.load %arg2[%c0_37, %c0_38] : memref<32x128xbf16, #tpu.memory_space<vmem>>, vector<32x128xbf16>
    %cst_39 = arith.constant dense<0.000000e+00> : vector<2x128xf32>
    %125 = tpu.matmul %123, %124, %cst_39 {dimension_numbers = #tpu.dot_dimension_numbers<[1], [0], [0], [1], [0, 0, 1, 1], [], []>} : vector<2x32xbf16>, vector<32x128xbf16>, vector<2x128xf32> -> vector<2x128xf32>
    %126 = vector.broadcast %122 : vector<1x128xf32> to vector<2x128xf32>
    %127 = arith.addf %126, %125 : vector<2x128xf32>
    %128 = arith.truncf %98 : vector<2x32xf32> to vector<2x32xbf16>
    %c0_40 = arith.constant 0 : index
    %c0_41 = arith.constant 0 : index
    %129 = vector.load %arg3[%c0_40, %c0_41] : memref<32x128xbf16, #tpu.memory_space<vmem>>, vector<32x128xbf16>
    %cst_42 = arith.constant dense<0.000000e+00> : vector<2x128xf32>
    %130 = tpu.matmul %128, %129, %cst_42 {dimension_numbers = #tpu.dot_dimension_numbers<[1], [0], [0], [1], [0, 0, 1, 1], [], []>} : vector<2x32xbf16>, vector<32x128xbf16>, vector<2x128xf32> -> vector<2x128xf32>
    %131 = arith.addf %127, %130 : vector<2x128xf32>
    %132 = vector.extract_strided_slice %131 {offsets = [0, 0], sizes = [2, 96], strides = [1, 1]} : vector<2x128xf32> to vector<2x96xf32>
    %133 = arith.negf %132 : vector<2x96xf32>
    %134 = math.exp %133 : vector<2x96xf32>
    %cst_43 = arith.constant 1.000000e+00 : f32
    %135 = vector.broadcast %cst_43 : f32 to vector<2x96xf32>
    %136 = arith.addf %135, %134 : vector<2x96xf32>
    %137 = arith.divf %135, %136 : vector<2x96xf32>
    %138 = vector.extract_strided_slice %131 {offsets = [0, 96], sizes = [2, 32], strides = [1, 1]} : vector<2x128xf32> to vector<2x32xf32>
    %139 = math.tanh %138 : vector<2x32xf32>
    %140 = vector.extract_strided_slice %137 {offsets = [0, 32], sizes = [2, 32], strides = [1, 1]} : vector<2x96xf32> to vector<2x32xf32>
    %141 = arith.mulf %140, %95 : vector<2x32xf32>
    %142 = vector.extract_strided_slice %137 {offsets = [0, 0], sizes = [2, 32], strides = [1, 1]} : vector<2x96xf32> to vector<2x32xf32>
    %143 = arith.mulf %142, %139 : vector<2x32xf32>
    %144 = arith.addf %141, %143 : vector<2x32xf32>
    %145 = vector.extract_strided_slice %137 {offsets = [0, 64], sizes = [2, 32], strides = [1, 1]} : vector<2x96xf32> to vector<2x32xf32>
    %146 = math.tanh %144 : vector<2x32xf32>
    %147 = arith.mulf %145, %146 : vector<2x32xf32>
    %c3_i32 = arith.constant 3 : i32
    %148 = arith.index_cast %c3_i32 : i32 to index
    %c0_44 = arith.constant 0 : index
    %c0_45 = arith.constant 0 : index
    %149 = vector.load %arg0[%148, %c0_44, %c0_45] : memref<8x2x128xf32, #tpu.memory_space<vmem>>, vector<1x2x128xf32>
    %150 = vector.shape_cast %149 : vector<1x2x128xf32> to vector<2x128xf32>
    %151 = arith.truncf %121 : vector<2x32xf32> to vector<2x32xbf16>
    %c0_46 = arith.constant 0 : index
    %c0_47 = arith.constant 0 : index
    %152 = vector.load %arg1[%c0_46, %c0_47] : memref<32x128xbf16, #tpu.memory_space<vmem>>, vector<32x128xbf16>
    %cst_48 = arith.constant dense<0.000000e+00> : vector<2x128xf32>
    %153 = tpu.matmul %151, %152, %cst_48 {dimension_numbers = #tpu.dot_dimension_numbers<[1], [0], [0], [1], [0, 0, 1, 1], [], []>} : vector<2x32xbf16>, vector<32x128xbf16>, vector<2x128xf32> -> vector<2x128xf32>
    %154 = arith.addf %150, %153 : vector<2x128xf32>
    %155 = vector.extract_strided_slice %154 {offsets = [0, 0], sizes = [2, 96], strides = [1, 1]} : vector<2x128xf32> to vector<2x96xf32>
    %156 = arith.negf %155 : vector<2x96xf32>
    %157 = math.exp %156 : vector<2x96xf32>
    %cst_49 = arith.constant 1.000000e+00 : f32
    %158 = vector.broadcast %cst_49 : f32 to vector<2x96xf32>
    %159 = arith.addf %158, %157 : vector<2x96xf32>
    %160 = arith.divf %158, %159 : vector<2x96xf32>
    %161 = vector.extract_strided_slice %154 {offsets = [0, 96], sizes = [2, 32], strides = [1, 1]} : vector<2x128xf32> to vector<2x32xf32>
    %162 = math.tanh %161 : vector<2x32xf32>
    %163 = vector.extract_strided_slice %160 {offsets = [0, 32], sizes = [2, 32], strides = [1, 1]} : vector<2x96xf32> to vector<2x32xf32>
    %164 = arith.mulf %163, %118 : vector<2x32xf32>
    %165 = vector.extract_strided_slice %160 {offsets = [0, 0], sizes = [2, 32], strides = [1, 1]} : vector<2x96xf32> to vector<2x32xf32>
    %166 = arith.mulf %165, %162 : vector<2x32xf32>
    %167 = arith.addf %164, %166 : vector<2x32xf32>
    %168 = vector.extract_strided_slice %160 {offsets = [0, 64], sizes = [2, 32], strides = [1, 1]} : vector<2x96xf32> to vector<2x32xf32>
    %169 = math.tanh %167 : vector<2x32xf32>
    %170 = arith.mulf %168, %169 : vector<2x32xf32>
    %c0_50 = arith.constant 0 : index
    %c0_51 = arith.constant 0 : index
    %171 = vector.load %arg4[%c0_50, %c0_51] : memref<1x128xf32, #tpu.memory_space<vmem>>, vector<1x128xf32>
    %172 = arith.truncf %170 : vector<2x32xf32> to vector<2x32xbf16>
    %c0_52 = arith.constant 0 : index
    %c0_53 = arith.constant 0 : index
    %173 = vector.load %arg2[%c0_52, %c0_53] : memref<32x128xbf16, #tpu.memory_space<vmem>>, vector<32x128xbf16>
    %cst_54 = arith.constant dense<0.000000e+00> : vector<2x128xf32>
    %174 = tpu.matmul %172, %173, %cst_54 {dimension_numbers = #tpu.dot_dimension_numbers<[1], [0], [0], [1], [0, 0, 1, 1], [], []>} : vector<2x32xbf16>, vector<32x128xbf16>, vector<2x128xf32> -> vector<2x128xf32>
    %175 = vector.broadcast %171 : vector<1x128xf32> to vector<2x128xf32>
    %176 = arith.addf %175, %174 : vector<2x128xf32>
    %177 = arith.truncf %147 : vector<2x32xf32> to vector<2x32xbf16>
    %c0_55 = arith.constant 0 : index
    %c0_56 = arith.constant 0 : index
    %178 = vector.load %arg3[%c0_55, %c0_56] : memref<32x128xbf16, #tpu.memory_space<vmem>>, vector<32x128xbf16>
    %cst_57 = arith.constant dense<0.000000e+00> : vector<2x128xf32>
    %179 = tpu.matmul %177, %178, %cst_57 {dimension_numbers = #tpu.dot_dimension_numbers<[1], [0], [0], [1], [0, 0, 1, 1], [], []>} : vector<2x32xbf16>, vector<32x128xbf16>, vector<2x128xf32> -> vector<2x128xf32>
    %180 = arith.addf %176, %179 : vector<2x128xf32>
    %181 = vector.extract_strided_slice %180 {offsets = [0, 0], sizes = [2, 96], strides = [1, 1]} : vector<2x128xf32> to vector<2x96xf32>
    %182 = arith.negf %181 : vector<2x96xf32>
    %183 = math.exp %182 : vector<2x96xf32>
    %cst_58 = arith.constant 1.000000e+00 : f32
    %184 = vector.broadcast %cst_58 : f32 to vector<2x96xf32>
    %185 = arith.addf %184, %183 : vector<2x96xf32>
    %186 = arith.divf %184, %185 : vector<2x96xf32>
    %187 = vector.extract_strided_slice %180 {offsets = [0, 96], sizes = [2, 32], strides = [1, 1]} : vector<2x128xf32> to vector<2x32xf32>
    %188 = math.tanh %187 : vector<2x32xf32>
    %189 = vector.extract_strided_slice %186 {offsets = [0, 32], sizes = [2, 32], strides = [1, 1]} : vector<2x96xf32> to vector<2x32xf32>
    %190 = arith.mulf %189, %144 : vector<2x32xf32>
    %191 = vector.extract_strided_slice %186 {offsets = [0, 0], sizes = [2, 32], strides = [1, 1]} : vector<2x96xf32> to vector<2x32xf32>
    %192 = arith.mulf %191, %188 : vector<2x32xf32>
    %193 = arith.addf %190, %192 : vector<2x32xf32>
    %194 = vector.extract_strided_slice %186 {offsets = [0, 64], sizes = [2, 32], strides = [1, 1]} : vector<2x96xf32> to vector<2x32xf32>
    %195 = math.tanh %193 : vector<2x32xf32>
    %196 = arith.mulf %194, %195 : vector<2x32xf32>
    %c4_i32 = arith.constant 4 : i32
    %197 = arith.index_cast %c4_i32 : i32 to index
    %c0_59 = arith.constant 0 : index
    %c0_60 = arith.constant 0 : index
    %198 = vector.load %arg0[%197, %c0_59, %c0_60] : memref<8x2x128xf32, #tpu.memory_space<vmem>>, vector<1x2x128xf32>
    %199 = vector.shape_cast %198 : vector<1x2x128xf32> to vector<2x128xf32>
    %200 = arith.truncf %170 : vector<2x32xf32> to vector<2x32xbf16>
    %c0_61 = arith.constant 0 : index
    %c0_62 = arith.constant 0 : index
    %201 = vector.load %arg1[%c0_61, %c0_62] : memref<32x128xbf16, #tpu.memory_space<vmem>>, vector<32x128xbf16>
    %cst_63 = arith.constant dense<0.000000e+00> : vector<2x128xf32>
    %202 = tpu.matmul %200, %201, %cst_63 {dimension_numbers = #tpu.dot_dimension_numbers<[1], [0], [0], [1], [0, 0, 1, 1], [], []>} : vector<2x32xbf16>, vector<32x128xbf16>, vector<2x128xf32> -> vector<2x128xf32>
    %203 = arith.addf %199, %202 : vector<2x128xf32>
    %204 = vector.extract_strided_slice %203 {offsets = [0, 0], sizes = [2, 96], strides = [1, 1]} : vector<2x128xf32> to vector<2x96xf32>
    %205 = arith.negf %204 : vector<2x96xf32>
    %206 = math.exp %205 : vector<2x96xf32>
    %cst_64 = arith.constant 1.000000e+00 : f32
    %207 = vector.broadcast %cst_64 : f32 to vector<2x96xf32>
    %208 = arith.addf %207, %206 : vector<2x96xf32>
    %209 = arith.divf %207, %208 : vector<2x96xf32>
    %210 = vector.extract_strided_slice %203 {offsets = [0, 96], sizes = [2, 32], strides = [1, 1]} : vector<2x128xf32> to vector<2x32xf32>
    %211 = math.tanh %210 : vector<2x32xf32>
    %212 = vector.extract_strided_slice %209 {offsets = [0, 32], sizes = [2, 32], strides = [1, 1]} : vector<2x96xf32> to vector<2x32xf32>
    %213 = arith.mulf %212, %167 : vector<2x32xf32>
    %214 = vector.extract_strided_slice %209 {offsets = [0, 0], sizes = [2, 32], strides = [1, 1]} : vector<2x96xf32> to vector<2x32xf32>
    %215 = arith.mulf %214, %211 : vector<2x32xf32>
    %216 = arith.addf %213, %215 : vector<2x32xf32>
    %217 = vector.extract_strided_slice %209 {offsets = [0, 64], sizes = [2, 32], strides = [1, 1]} : vector<2x96xf32> to vector<2x32xf32>
    %218 = math.tanh %216 : vector<2x32xf32>
    %219 = arith.mulf %217, %218 : vector<2x32xf32>
    %c0_65 = arith.constant 0 : index
    %c0_66 = arith.constant 0 : index
    %220 = vector.load %arg4[%c0_65, %c0_66] : memref<1x128xf32, #tpu.memory_space<vmem>>, vector<1x128xf32>
    %221 = arith.truncf %219 : vector<2x32xf32> to vector<2x32xbf16>
    %c0_67 = arith.constant 0 : index
    %c0_68 = arith.constant 0 : index
    %222 = vector.load %arg2[%c0_67, %c0_68] : memref<32x128xbf16, #tpu.memory_space<vmem>>, vector<32x128xbf16>
    %cst_69 = arith.constant dense<0.000000e+00> : vector<2x128xf32>
    %223 = tpu.matmul %221, %222, %cst_69 {dimension_numbers = #tpu.dot_dimension_numbers<[1], [0], [0], [1], [0, 0, 1, 1], [], []>} : vector<2x32xbf16>, vector<32x128xbf16>, vector<2x128xf32> -> vector<2x128xf32>
    %224 = vector.broadcast %220 : vector<1x128xf32> to vector<2x128xf32>
    %225 = arith.addf %224, %223 : vector<2x128xf32>
    %226 = arith.truncf %196 : vector<2x32xf32> to vector<2x32xbf16>
    %c0_70 = arith.constant 0 : index
    %c0_71 = arith.constant 0 : index
    %227 = vector.load %arg3[%c0_70, %c0_71] : memref<32x128xbf16, #tpu.memory_space<vmem>>, vector<32x128xbf16>
    %cst_72 = arith.constant dense<0.000000e+00> : vector<2x128xf32>
    %228 = tpu.matmul %226, %227, %cst_72 {dimension_numbers = #tpu.dot_dimension_numbers<[1], [0], [0], [1], [0, 0, 1, 1], [], []>} : vector<2x32xbf16>, vector<32x128xbf16>, vector<2x128xf32> -> vector<2x128xf32>
    %229 = arith.addf %225, %228 : vector<2x128xf32>
    %230 = vector.extract_strided_slice %229 {offsets = [0, 0], sizes = [2, 96], strides = [1, 1]} : vector<2x128xf32> to vector<2x96xf32>
    %231 = arith.negf %230 : vector<2x96xf32>
    %232 = math.exp %231 : vector<2x96xf32>
    %cst_73 = arith.constant 1.000000e+00 : f32
    %233 = vector.broadcast %cst_73 : f32 to vector<2x96xf32>
    %234 = arith.addf %233, %232 : vector<2x96xf32>
    %235 = arith.divf %233, %234 : vector<2x96xf32>
    %236 = vector.extract_strided_slice %229 {offsets = [0, 96], sizes = [2, 32], strides = [1, 1]} : vector<2x128xf32> to vector<2x32xf32>
    %237 = math.tanh %236 : vector<2x32xf32>
    %238 = vector.extract_strided_slice %235 {offsets = [0, 32], sizes = [2, 32], strides = [1, 1]} : vector<2x96xf32> to vector<2x32xf32>
    %239 = arith.mulf %238, %193 : vector<2x32xf32>
    %240 = vector.extract_strided_slice %235 {offsets = [0, 0], sizes = [2, 32], strides = [1, 1]} : vector<2x96xf32> to vector<2x32xf32>
    %241 = arith.mulf %240, %237 : vector<2x32xf32>
    %242 = arith.addf %239, %241 : vector<2x32xf32>
    %243 = vector.extract_strided_slice %235 {offsets = [0, 64], sizes = [2, 32], strides = [1, 1]} : vector<2x96xf32> to vector<2x32xf32>
    %244 = math.tanh %242 : vector<2x32xf32>
    %245 = arith.mulf %243, %244 : vector<2x32xf32>
    %c5_i32 = arith.constant 5 : i32
    %246 = arith.index_cast %c5_i32 : i32 to index
    %c0_74 = arith.constant 0 : index
    %c0_75 = arith.constant 0 : index
    %247 = vector.load %arg0[%246, %c0_74, %c0_75] : memref<8x2x128xf32, #tpu.memory_space<vmem>>, vector<1x2x128xf32>
    %248 = vector.shape_cast %247 : vector<1x2x128xf32> to vector<2x128xf32>
    %249 = arith.truncf %219 : vector<2x32xf32> to vector<2x32xbf16>
    %c0_76 = arith.constant 0 : index
    %c0_77 = arith.constant 0 : index
    %250 = vector.load %arg1[%c0_76, %c0_77] : memref<32x128xbf16, #tpu.memory_space<vmem>>, vector<32x128xbf16>
    %cst_78 = arith.constant dense<0.000000e+00> : vector<2x128xf32>
    %251 = tpu.matmul %249, %250, %cst_78 {dimension_numbers = #tpu.dot_dimension_numbers<[1], [0], [0], [1], [0, 0, 1, 1], [], []>} : vector<2x32xbf16>, vector<32x128xbf16>, vector<2x128xf32> -> vector<2x128xf32>
    %252 = arith.addf %248, %251 : vector<2x128xf32>
    %253 = vector.extract_strided_slice %252 {offsets = [0, 0], sizes = [2, 96], strides = [1, 1]} : vector<2x128xf32> to vector<2x96xf32>
    %254 = arith.negf %253 : vector<2x96xf32>
    %255 = math.exp %254 : vector<2x96xf32>
    %cst_79 = arith.constant 1.000000e+00 : f32
    %256 = vector.broadcast %cst_79 : f32 to vector<2x96xf32>
    %257 = arith.addf %256, %255 : vector<2x96xf32>
    %258 = arith.divf %256, %257 : vector<2x96xf32>
    %259 = vector.extract_strided_slice %252 {offsets = [0, 96], sizes = [2, 32], strides = [1, 1]} : vector<2x128xf32> to vector<2x32xf32>
    %260 = math.tanh %259 : vector<2x32xf32>
    %261 = vector.extract_strided_slice %258 {offsets = [0, 32], sizes = [2, 32], strides = [1, 1]} : vector<2x96xf32> to vector<2x32xf32>
    %262 = arith.mulf %261, %216 : vector<2x32xf32>
    %263 = vector.extract_strided_slice %258 {offsets = [0, 0], sizes = [2, 32], strides = [1, 1]} : vector<2x96xf32> to vector<2x32xf32>
    %264 = arith.mulf %263, %260 : vector<2x32xf32>
    %265 = arith.addf %262, %264 : vector<2x32xf32>
    %266 = vector.extract_strided_slice %258 {offsets = [0, 64], sizes = [2, 32], strides = [1, 1]} : vector<2x96xf32> to vector<2x32xf32>
    %267 = math.tanh %265 : vector<2x32xf32>
    %268 = arith.mulf %266, %267 : vector<2x32xf32>
    %c0_80 = arith.constant 0 : index
    %c0_81 = arith.constant 0 : index
    %269 = vector.load %arg4[%c0_80, %c0_81] : memref<1x128xf32, #tpu.memory_space<vmem>>, vector<1x128xf32>
    %270 = arith.truncf %268 : vector<2x32xf32> to vector<2x32xbf16>
    %c0_82 = arith.constant 0 : index
    %c0_83 = arith.constant 0 : index
    %271 = vector.load %arg2[%c0_82, %c0_83] : memref<32x128xbf16, #tpu.memory_space<vmem>>, vector<32x128xbf16>
    %cst_84 = arith.constant dense<0.000000e+00> : vector<2x128xf32>
    %272 = tpu.matmul %270, %271, %cst_84 {dimension_numbers = #tpu.dot_dimension_numbers<[1], [0], [0], [1], [0, 0, 1, 1], [], []>} : vector<2x32xbf16>, vector<32x128xbf16>, vector<2x128xf32> -> vector<2x128xf32>
    %273 = vector.broadcast %269 : vector<1x128xf32> to vector<2x128xf32>
    %274 = arith.addf %273, %272 : vector<2x128xf32>
    %275 = arith.truncf %245 : vector<2x32xf32> to vector<2x32xbf16>
    %c0_85 = arith.constant 0 : index
    %c0_86 = arith.constant 0 : index
    %276 = vector.load %arg3[%c0_85, %c0_86] : memref<32x128xbf16, #tpu.memory_space<vmem>>, vector<32x128xbf16>
    %cst_87 = arith.constant dense<0.000000e+00> : vector<2x128xf32>
    %277 = tpu.matmul %275, %276, %cst_87 {dimension_numbers = #tpu.dot_dimension_numbers<[1], [0], [0], [1], [0, 0, 1, 1], [], []>} : vector<2x32xbf16>, vector<32x128xbf16>, vector<2x128xf32> -> vector<2x128xf32>
    %278 = arith.addf %274, %277 : vector<2x128xf32>
    %279 = vector.extract_strided_slice %278 {offsets = [0, 0], sizes = [2, 96], strides = [1, 1]} : vector<2x128xf32> to vector<2x96xf32>
    %280 = arith.negf %279 : vector<2x96xf32>
    %281 = math.exp %280 : vector<2x96xf32>
    %cst_88 = arith.constant 1.000000e+00 : f32
    %282 = vector.broadcast %cst_88 : f32 to vector<2x96xf32>
    %283 = arith.addf %282, %281 : vector<2x96xf32>
    %284 = arith.divf %282, %283 : vector<2x96xf32>
    %285 = vector.extract_strided_slice %278 {offsets = [0, 96], sizes = [2, 32], strides = [1, 1]} : vector<2x128xf32> to vector<2x32xf32>
    %286 = math.tanh %285 : vector<2x32xf32>
    %287 = vector.extract_strided_slice %284 {offsets = [0, 32], sizes = [2, 32], strides = [1, 1]} : vector<2x96xf32> to vector<2x32xf32>
    %288 = arith.mulf %287, %242 : vector<2x32xf32>
    %289 = vector.extract_strided_slice %284 {offsets = [0, 0], sizes = [2, 32], strides = [1, 1]} : vector<2x96xf32> to vector<2x32xf32>
    %290 = arith.mulf %289, %286 : vector<2x32xf32>
    %291 = arith.addf %288, %290 : vector<2x32xf32>
    %292 = vector.extract_strided_slice %284 {offsets = [0, 64], sizes = [2, 32], strides = [1, 1]} : vector<2x96xf32> to vector<2x32xf32>
    %293 = math.tanh %291 : vector<2x32xf32>
    %294 = arith.mulf %292, %293 : vector<2x32xf32>
    %c6_i32 = arith.constant 6 : i32
    %295 = arith.index_cast %c6_i32 : i32 to index
    %c0_89 = arith.constant 0 : index
    %c0_90 = arith.constant 0 : index
    %296 = vector.load %arg0[%295, %c0_89, %c0_90] : memref<8x2x128xf32, #tpu.memory_space<vmem>>, vector<1x2x128xf32>
    %297 = vector.shape_cast %296 : vector<1x2x128xf32> to vector<2x128xf32>
    %298 = arith.truncf %268 : vector<2x32xf32> to vector<2x32xbf16>
    %c0_91 = arith.constant 0 : index
    %c0_92 = arith.constant 0 : index
    %299 = vector.load %arg1[%c0_91, %c0_92] : memref<32x128xbf16, #tpu.memory_space<vmem>>, vector<32x128xbf16>
    %cst_93 = arith.constant dense<0.000000e+00> : vector<2x128xf32>
    %300 = tpu.matmul %298, %299, %cst_93 {dimension_numbers = #tpu.dot_dimension_numbers<[1], [0], [0], [1], [0, 0, 1, 1], [], []>} : vector<2x32xbf16>, vector<32x128xbf16>, vector<2x128xf32> -> vector<2x128xf32>
    %301 = arith.addf %297, %300 : vector<2x128xf32>
    %302 = vector.extract_strided_slice %301 {offsets = [0, 0], sizes = [2, 96], strides = [1, 1]} : vector<2x128xf32> to vector<2x96xf32>
    %303 = arith.negf %302 : vector<2x96xf32>
    %304 = math.exp %303 : vector<2x96xf32>
    %cst_94 = arith.constant 1.000000e+00 : f32
    %305 = vector.broadcast %cst_94 : f32 to vector<2x96xf32>
    %306 = arith.addf %305, %304 : vector<2x96xf32>
    %307 = arith.divf %305, %306 : vector<2x96xf32>
    %308 = vector.extract_strided_slice %301 {offsets = [0, 96], sizes = [2, 32], strides = [1, 1]} : vector<2x128xf32> to vector<2x32xf32>
    %309 = math.tanh %308 : vector<2x32xf32>
    %310 = vector.extract_strided_slice %307 {offsets = [0, 32], sizes = [2, 32], strides = [1, 1]} : vector<2x96xf32> to vector<2x32xf32>
    %311 = arith.mulf %310, %265 : vector<2x32xf32>
    %312 = vector.extract_strided_slice %307 {offsets = [0, 0], sizes = [2, 32], strides = [1, 1]} : vector<2x96xf32> to vector<2x32xf32>
    %313 = arith.mulf %312, %309 : vector<2x32xf32>
    %314 = arith.addf %311, %313 : vector<2x32xf32>
    %315 = vector.extract_strided_slice %307 {offsets = [0, 64], sizes = [2, 32], strides = [1, 1]} : vector<2x96xf32> to vector<2x32xf32>
    %316 = math.tanh %314 : vector<2x32xf32>
    %317 = arith.mulf %315, %316 : vector<2x32xf32>
    %c0_95 = arith.constant 0 : index
    %c0_96 = arith.constant 0 : index
    %318 = vector.load %arg4[%c0_95, %c0_96] : memref<1x128xf32, #tpu.memory_space<vmem>>, vector<1x128xf32>
    %319 = arith.truncf %317 : vector<2x32xf32> to vector<2x32xbf16>
    %c0_97 = arith.constant 0 : index
    %c0_98 = arith.constant 0 : index
    %320 = vector.load %arg2[%c0_97, %c0_98] : memref<32x128xbf16, #tpu.memory_space<vmem>>, vector<32x128xbf16>
    %cst_99 = arith.constant dense<0.000000e+00> : vector<2x128xf32>
    %321 = tpu.matmul %319, %320, %cst_99 {dimension_numbers = #tpu.dot_dimension_numbers<[1], [0], [0], [1], [0, 0, 1, 1], [], []>} : vector<2x32xbf16>, vector<32x128xbf16>, vector<2x128xf32> -> vector<2x128xf32>
    %322 = vector.broadcast %318 : vector<1x128xf32> to vector<2x128xf32>
    %323 = arith.addf %322, %321 : vector<2x128xf32>
    %324 = arith.truncf %294 : vector<2x32xf32> to vector<2x32xbf16>
    %c0_100 = arith.constant 0 : index
    %c0_101 = arith.constant 0 : index
    %325 = vector.load %arg3[%c0_100, %c0_101] : memref<32x128xbf16, #tpu.memory_space<vmem>>, vector<32x128xbf16>
    %cst_102 = arith.constant dense<0.000000e+00> : vector<2x128xf32>
    %326 = tpu.matmul %324, %325, %cst_102 {dimension_numbers = #tpu.dot_dimension_numbers<[1], [0], [0], [1], [0, 0, 1, 1], [], []>} : vector<2x32xbf16>, vector<32x128xbf16>, vector<2x128xf32> -> vector<2x128xf32>
    %327 = arith.addf %323, %326 : vector<2x128xf32>
    %328 = vector.extract_strided_slice %327 {offsets = [0, 0], sizes = [2, 96], strides = [1, 1]} : vector<2x128xf32> to vector<2x96xf32>
    %329 = arith.negf %328 : vector<2x96xf32>
    %330 = math.exp %329 : vector<2x96xf32>
    %cst_103 = arith.constant 1.000000e+00 : f32
    %331 = vector.broadcast %cst_103 : f32 to vector<2x96xf32>
    %332 = arith.addf %331, %330 : vector<2x96xf32>
    %333 = arith.divf %331, %332 : vector<2x96xf32>
    %334 = vector.extract_strided_slice %327 {offsets = [0, 96], sizes = [2, 32], strides = [1, 1]} : vector<2x128xf32> to vector<2x32xf32>
    %335 = math.tanh %334 : vector<2x32xf32>
    %336 = vector.extract_strided_slice %333 {offsets = [0, 32], sizes = [2, 32], strides = [1, 1]} : vector<2x96xf32> to vector<2x32xf32>
    %337 = arith.mulf %336, %291 : vector<2x32xf32>
    %338 = vector.extract_strided_slice %333 {offsets = [0, 0], sizes = [2, 32], strides = [1, 1]} : vector<2x96xf32> to vector<2x32xf32>
    %339 = arith.mulf %338, %335 : vector<2x32xf32>
    %340 = arith.addf %337, %339 : vector<2x32xf32>
    %341 = vector.extract_strided_slice %333 {offsets = [0, 64], sizes = [2, 32], strides = [1, 1]} : vector<2x96xf32> to vector<2x32xf32>
    %342 = math.tanh %340 : vector<2x32xf32>
    %343 = arith.mulf %341, %342 : vector<2x32xf32>
    %c7_i32 = arith.constant 7 : i32
    %344 = arith.index_cast %c7_i32 : i32 to index
    %c0_104 = arith.constant 0 : index
    %c0_105 = arith.constant 0 : index
    %345 = vector.load %arg0[%344, %c0_104, %c0_105] : memref<8x2x128xf32, #tpu.memory_space<vmem>>, vector<1x2x128xf32>
    %346 = vector.shape_cast %345 : vector<1x2x128xf32> to vector<2x128xf32>
    %347 = arith.truncf %317 : vector<2x32xf32> to vector<2x32xbf16>
    %c0_106 = arith.constant 0 : index
    %c0_107 = arith.constant 0 : index
    %348 = vector.load %arg1[%c0_106, %c0_107] : memref<32x128xbf16, #tpu.memory_space<vmem>>, vector<32x128xbf16>
    %cst_108 = arith.constant dense<0.000000e+00> : vector<2x128xf32>
    %349 = tpu.matmul %347, %348, %cst_108 {dimension_numbers = #tpu.dot_dimension_numbers<[1], [0], [0], [1], [0, 0, 1, 1], [], []>} : vector<2x32xbf16>, vector<32x128xbf16>, vector<2x128xf32> -> vector<2x128xf32>
    %350 = arith.addf %346, %349 : vector<2x128xf32>
    %351 = vector.extract_strided_slice %350 {offsets = [0, 0], sizes = [2, 96], strides = [1, 1]} : vector<2x128xf32> to vector<2x96xf32>
    %352 = arith.negf %351 : vector<2x96xf32>
    %353 = math.exp %352 : vector<2x96xf32>
    %cst_109 = arith.constant 1.000000e+00 : f32
    %354 = vector.broadcast %cst_109 : f32 to vector<2x96xf32>
    %355 = arith.addf %354, %353 : vector<2x96xf32>
    %356 = arith.divf %354, %355 : vector<2x96xf32>
    %357 = vector.extract_strided_slice %350 {offsets = [0, 96], sizes = [2, 32], strides = [1, 1]} : vector<2x128xf32> to vector<2x32xf32>
    %358 = math.tanh %357 : vector<2x32xf32>
    %359 = vector.extract_strided_slice %356 {offsets = [0, 32], sizes = [2, 32], strides = [1, 1]} : vector<2x96xf32> to vector<2x32xf32>
    %360 = arith.mulf %359, %314 : vector<2x32xf32>
    %361 = vector.extract_strided_slice %356 {offsets = [0, 0], sizes = [2, 32], strides = [1, 1]} : vector<2x96xf32> to vector<2x32xf32>
    %362 = arith.mulf %361, %358 : vector<2x32xf32>
    %363 = arith.addf %360, %362 : vector<2x32xf32>
    %364 = vector.extract_strided_slice %356 {offsets = [0, 64], sizes = [2, 32], strides = [1, 1]} : vector<2x96xf32> to vector<2x32xf32>
    %365 = math.tanh %363 : vector<2x32xf32>
    %366 = arith.mulf %364, %365 : vector<2x32xf32>
    %c0_110 = arith.constant 0 : index
    %c0_111 = arith.constant 0 : index
    %367 = vector.load %arg4[%c0_110, %c0_111] : memref<1x128xf32, #tpu.memory_space<vmem>>, vector<1x128xf32>
    %368 = arith.truncf %366 : vector<2x32xf32> to vector<2x32xbf16>
    %c0_112 = arith.constant 0 : index
    %c0_113 = arith.constant 0 : index
    %369 = vector.load %arg2[%c0_112, %c0_113] : memref<32x128xbf16, #tpu.memory_space<vmem>>, vector<32x128xbf16>
    %cst_114 = arith.constant dense<0.000000e+00> : vector<2x128xf32>
    %370 = tpu.matmul %368, %369, %cst_114 {dimension_numbers = #tpu.dot_dimension_numbers<[1], [0], [0], [1], [0, 0, 1, 1], [], []>} : vector<2x32xbf16>, vector<32x128xbf16>, vector<2x128xf32> -> vector<2x128xf32>
    %371 = vector.broadcast %367 : vector<1x128xf32> to vector<2x128xf32>
    %372 = arith.addf %371, %370 : vector<2x128xf32>
    %373 = arith.truncf %343 : vector<2x32xf32> to vector<2x32xbf16>
    %c0_115 = arith.constant 0 : index
    %c0_116 = arith.constant 0 : index
    %374 = vector.load %arg3[%c0_115, %c0_116] : memref<32x128xbf16, #tpu.memory_space<vmem>>, vector<32x128xbf16>
    %cst_117 = arith.constant dense<0.000000e+00> : vector<2x128xf32>
    %375 = tpu.matmul %373, %374, %cst_117 {dimension_numbers = #tpu.dot_dimension_numbers<[1], [0], [0], [1], [0, 0, 1, 1], [], []>} : vector<2x32xbf16>, vector<32x128xbf16>, vector<2x128xf32> -> vector<2x128xf32>
    %376 = arith.addf %372, %375 : vector<2x128xf32>
    %377 = vector.extract_strided_slice %376 {offsets = [0, 0], sizes = [2, 96], strides = [1, 1]} : vector<2x128xf32> to vector<2x96xf32>
    %378 = arith.negf %377 : vector<2x96xf32>
    %379 = math.exp %378 : vector<2x96xf32>
    %cst_118 = arith.constant 1.000000e+00 : f32
    %380 = vector.broadcast %cst_118 : f32 to vector<2x96xf32>
    %381 = arith.addf %380, %379 : vector<2x96xf32>
    %382 = arith.divf %380, %381 : vector<2x96xf32>
    %383 = vector.extract_strided_slice %376 {offsets = [0, 96], sizes = [2, 32], strides = [1, 1]} : vector<2x128xf32> to vector<2x32xf32>
    %384 = math.tanh %383 : vector<2x32xf32>
    %385 = vector.extract_strided_slice %382 {offsets = [0, 32], sizes = [2, 32], strides = [1, 1]} : vector<2x96xf32> to vector<2x32xf32>
    %386 = arith.mulf %385, %340 : vector<2x32xf32>
    %387 = vector.extract_strided_slice %382 {offsets = [0, 0], sizes = [2, 32], strides = [1, 1]} : vector<2x96xf32> to vector<2x32xf32>
    %388 = arith.mulf %387, %384 : vector<2x32xf32>
    %389 = arith.addf %386, %388 : vector<2x32xf32>
    %390 = vector.extract_strided_slice %382 {offsets = [0, 64], sizes = [2, 32], strides = [1, 1]} : vector<2x96xf32> to vector<2x32xf32>
    %391 = math.tanh %389 : vector<2x32xf32>
    %392 = arith.mulf %390, %391 : vector<2x32xf32>
    %c8_i32 = arith.constant 8 : i32
    %393 = arith.truncf %392 : vector<2x32xf32> to vector<2x32xbf16>
    %c0_119 = arith.constant 0 : index
    %c0_120 = arith.constant 0 : index
    %394 = vector.load %arg5[%c0_119, %c0_120] : memref<32x32xbf16, #tpu.memory_space<vmem>>, vector<32x32xbf16>
    %cst_121 = arith.constant dense<0.000000e+00> : vector<2x32xf32>
    %395 = tpu.matmul %393, %394, %cst_121 {dimension_numbers = #tpu.dot_dimension_numbers<[1], [0], [0], [1], [0, 0, 1, 1], [], []>} : vector<2x32xbf16>, vector<32x32xbf16>, vector<2x32xf32> -> vector<2x32xf32>
    %c0_122 = arith.constant 0 : index
    %c0_123 = arith.constant 0 : index
    %396 = vector.load %arg6[%c0_122, %c0_123] : memref<1x32xf32, #tpu.memory_space<vmem>>, vector<1x32xf32>
    %397 = vector.broadcast %396 : vector<1x32xf32> to vector<2x32xf32>
    %398 = arith.addf %395, %397 : vector<2x32xf32>
    %c0_124 = arith.constant 0 : index
    %c0_125 = arith.constant 0 : index
    %399 = vector.load %arg7[%c0_124, %c0_125] : memref<2x32xf32, #tpu.memory_space<vmem>>, vector<2x32xf32>
    tpu.vector_store %arg7[%c0_124, %c0_125], %398 {strides = array<i32>} : memref<2x32xf32, #tpu.memory_space<vmem>>, vector<2x32xf32>,
    return
  }
}

</mosaic_0001>

<llo_original>
// kernel: tpu_custom_call.1
$region0: #{tpu_custom_call.1}
  #allocation0 [shape = 'u32[]', space=smem, size = 0x4, offset = 0x4, fixed_abs, tag = 'smem constant byte address 0x4 - core index']
  #allocation1 [shape = 'u32[144,128]{1,0:T(1,128)}', space=vmem, size = 0x12000, scoped, tag = 'internal scratch']
  %s0 = inlined_call_operand.hbm [shape: f32[8,2,128], index: 0, kind: input, shape index: {}]
  %s1 = inlined_call_operand.hbm [shape: bf16[32,128], index: 1, kind: input, shape index: {}]
  %s2 = inlined_call_operand.hbm [shape: bf16[32,128], index: 2, kind: input, shape index: {}]
  %s3 = inlined_call_operand.hbm [shape: bf16[32,128], index: 3, kind: input, shape index: {}]
  %s4 = inlined_call_operand.vmem [shape: f32[1,128], index: 4, kind: input, shape index: {}]
  %s5 = inlined_call_operand.vmem [shape: bf16[32,32], index: 5, kind: input, shape index: {}]
  %s6 = inlined_call_operand.vmem [shape: f32[1,32], index: 6, kind: input, shape index: {}]
  %s7 = inlined_call_operand.hbm [shape: f32[2,32], index: 7, kind: output, shape index: {}]
  %s8 = sld [smem:[#allocation0]]
  $region54: #{tpu_custom_call.1} parent=0
    _
  %s10 = ssub.s32 1, %s8
  %s11 = scalar_select 0, %s10, %s8
  $region1: #{tpu_custom_call.1} parent=0
    #allocation2 [shape = 'u8[8192]{0}', space=vmem, size = 0x2000, scoped, tag = 'input window, operand 0, single buffered']
    #allocation3 [shape = 's32[1]{0}', space=sflag, size = 0x4, scoped, tag = 'scoped memory for tpu_custom_call.1']
    #allocation4 [shape = 's32[1]{0}', space=sflag, size = 0x4, scoped, tag = 'scoped memory for tpu_custom_call.1']
    #allocation5 [shape = 'u8[8192]{0}', space=vmem, size = 0x2000, scoped, tag = 'input window, operand 1, single buffered']
    #allocation6 [shape = 's32[1]{0}', space=sflag, size = 0x4, scoped, tag = 'scoped memory for tpu_custom_call.1']
    #allocation7 [shape = 'u8[8192]{0}', space=vmem, size = 0x2000, scoped, tag = 'input window, operand 2, single buffered']
    #allocation8 [shape = 'u8[8192]{0}', space=vmem, size = 0x2000, scoped, tag = 'input window, operand 3, single buffered']
    #allocation9 [shape = 's32[1]{0}', space=sflag, size = 0x4, scoped, tag = 'scoped memory for tpu_custom_call.1']
    #allocation10 [shape = 'u8[1024]{0}', space=vmem, size = 0x400, scoped, tag = 'output window, operand 0, single buffered']
    %12 = vsyncpa [#allocation3], 0
    %13 = vsyncpa [#allocation6], 0
    %14 = vsyncpa [#allocation9], 0
    %15 = vsyncpa [#allocation4], 0
    // Predicated region
    $region2: #{tpu_custom_call.1} parent=1 // pred_check
      _
    $region3: #{tpu_custom_call.1} parent=1 // pred_check_branch
      %17 = sbr.rel (0) target = $region5
    $region4: #{tpu_custom_call.1} parent=1 // pred_region
      %s19 = ssub.s32 256, 256
      %20 = vsyncadd [#allocation3], %s19
      %s21 = sshll.u32 [#allocation2], 4
      %s22 = int_to_ptr.vmem [resolvable:$true] %s21
      %27 = dma.hbm_to_vmem [thread:$0]  %s0, 256, %s22, [#allocation3], 32, 32, 2
    $region5: #{tpu_custom_call.1} parent=1 // pred_fallthru
      _
    // Predicated region
    $region6: #{tpu_custom_call.1} parent=1 // pred_check
      _
    $region7: #{tpu_custom_call.1} parent=1 // pred_check_branch
      %29 = sbr.rel (0) target = $region9
    $region8: #{tpu_custom_call.1} parent=1 // pred_region
      %s31 = ssub.s32 256, 256
      %32 = vsyncadd [#allocation6], %s31
      %s33 = sshll.u32 [#allocation5], 4
      %s34 = int_to_ptr.vmem [resolvable:$true] %s33
      %39 = dma.hbm_to_vmem [thread:$0]  %s1, 256, %s34, [#allocation6], 64, 64, 4
    $region9: #{tpu_custom_call.1} parent=1 // pred_fallthru
      _
    // Predicated region
    $region10: #{tpu_custom_call.1} parent=1 // pred_check
      _
    $region11: #{tpu_custom_call.1} parent=1 // pred_check_branch
      %41 = sbr.rel (0) target = $region13
    $region12: #{tpu_custom_call.1} parent=1 // pred_region
      %s43 = ssub.s32 256, 256
      %44 = vsyncadd [#allocation6], %s43
      %s45 = sshll.u32 [#allocation7], 4
      %s46 = int_to_ptr.vmem [resolvable:$true] %s45
      %51 = dma.hbm_to_vmem [thread:$0]  %s2, 256, %s46, [#allocation6], 64, 64, 4
    $region13: #{tpu_custom_call.1} parent=1 // pred_fallthru
      _
    // Predicated region
    $region14: #{tpu_custom_call.1} parent=1 // pred_check
      _
    $region15: #{tpu_custom_call.1} parent=1 // pred_check_branch
      %53 = sbr.rel (0) target = $region17
    $region16: #{tpu_custom_call.1} parent=1 // pred_region
      %s55 = ssub.s32 256, 256
      %56 = vsyncadd [#allocation9], %s55
      %s57 = sshll.u32 [#allocation8], 4
      %s58 = int_to_ptr.vmem [resolvable:$true] %s57
      %63 = dma.hbm_to_vmem [thread:$0]  %s3, 256, %s58, [#allocation9], 64, 64, 4
    $region17: #{tpu_custom_call.1} parent=1 // pred_fallthru
      _
    // Predicated region
    $region18: #{tpu_custom_call.1} parent=1 // pred_check
      _
    $region19: #{tpu_custom_call.1} parent=1 // pred_check_branch
      %65 = sbr.rel (0) target = $region21
    $region20: #{tpu_custom_call.1} parent=1 // pred_region
      _
    $region21: #{tpu_custom_call.1} parent=1 // pred_fallthru
      _
    // Predicated region
    $region22: #{tpu_custom_call.1} parent=1 // pred_check
      _
    $region23: #{tpu_custom_call.1} parent=1 // pred_check_branch
      %67 = sbr.rel (0) target = $region25
    $region24: #{tpu_custom_call.1} parent=1 // pred_region
      _
    $region25: #{tpu_custom_call.1} parent=1 // pred_fallthru
      _
    // Predicated region
    $region26: #{tpu_custom_call.1} parent=1 // pred_check
      _
    $region27: #{tpu_custom_call.1} parent=1 // pred_check_branch
      %69 = sbr.rel (0) target = $region29
    $region28: #{tpu_custom_call.1} parent=1 // pred_region
      _
    $region29: #{tpu_custom_call.1} parent=1 // pred_fallthru
      _
    // Predicated region
    $region30: #{tpu_custom_call.1} parent=1 // pred_check
      _
    $region31: #{tpu_custom_call.1} parent=1 // pred_check_branch
      %71 = sbr.rel (0) target = $region33
    $region32: #{tpu_custom_call.1} parent=1 // pred_region
      %72 = dma.done [#allocation3], 256
    $region33: #{tpu_custom_call.1} parent=1 // pred_fallthru
      _
    // Predicated region
    $region34: #{tpu_custom_call.1} parent=1 // pred_check
      _
    $region35: #{tpu_custom_call.1} parent=1 // pred_check_branch
      %74 = sbr.rel (0) target = $region37
    $region36: #{tpu_custom_call.1} parent=1 // pred_region
      %75 = dma.done [#allocation6], 256
    $region37: #{tpu_custom_call.1} parent=1 // pred_fallthru
      _
    // Predicated region
    $region38: #{tpu_custom_call.1} parent=1 // pred_check
      _
    $region39: #{tpu_custom_call.1} parent=1 // pred_check_branch
      %77 = sbr.rel (0) target = $region41
    $region40: #{tpu_custom_call.1} parent=1 // pred_region
      %78 = dma.done [#allocation6], 256
    $region41: #{tpu_custom_call.1} parent=1 // pred_fallthru
      _
    // Predicated region
    $region42: #{tpu_custom_call.1} parent=1 // pred_check
      _
    $region43: #{tpu_custom_call.1} parent=1 // pred_check_branch
      %80 = sbr.rel (0) target = $region45
    $region44: #{tpu_custom_call.1} parent=1 // pred_region
      %81 = dma.done [#allocation9], 256
    $region45: #{tpu_custom_call.1} parent=1 // pred_fallthru
      _
    %v83 = vld [vmem:[#allocation2] sm:$0x3]
    %v84 = vld [vmem:[#allocation5] sm:$0xf]
    %v85 = vld [vmem:[#allocation5 + $0x4] sm:$0xf]
    %v86 = vld [vmem:[#allocation5 + $0x8] sm:$0xf]
    %v87 = vld [vmem:[#allocation5 + $0xc] sm:$0xf]
    %v92 = vunpack.c.l.b16 %v84
    %v93 = vunpack.c.l.b16 %v85
    %v94 = vunpack.c.l.b16 %v86
    %v95 = vunpack.c.l.b16 %v87
    %v96 = vpack.c.b16 %v93, %v92
    %v97 = vpack.c.b16 %v95, %v94
    %vm100 = vcmask 261120
    %v102 = vsel %vm100, 0, 0
    %104 = vmatprep.subr.bf16.mxu0 0
    %105 = vmatpush1.bf16.msra.mxu0 %v96
    %106 = vmatprep.subr.bf16.mxu0 0
    %107 = vmatpush1.bf16.msra.mxu0 %v97
    %108 = vmatprep.subr.bf16.mxu0 0
    %109 = vmatpush1.bf16.msra.mxu0 0
    %110 = vmatprep.subr.bf16.mxu0 0
    %111 = vmatpush1.bf16.msra.mxu0 0
    %112 = vmatprep.subr.bf16.mxu0 0
    %113 = vmatpush1.bf16.msra.mxu0 0
    %114 = vmatprep.subr.bf16.mxu0 0
    %115 = vmatpush1.bf16.msra.mxu0 0
    %116 = vmatprep.subr.bf16.mxu0 0
    %117 = vmatpush1.bf16.msra.mxu0 0
    %118 = vmatprep.subr.bf16.mxu0 0
    %119 = vmatpush1.bf16.msra.mxu0 0
    %120 = vmatprep.subr.bf16.mxu0 0
    %121 = vmatpush1.bf16.msra.mxu0 0
    %122 = vmatprep.subr.bf16.mxu0 0
    %123 = vmatpush1.bf16.msra.mxu0 0
    %124 = vmatprep.subr.bf16.mxu0 0
    %125 = vmatpush1.bf16.msra.mxu0 0
    %126 = vmatprep.subr.bf16.mxu0 0
    %127 = vmatpush1.bf16.msra.mxu0 0
    %128 = vmatprep.subr.bf16.mxu0 0
    %129 = vmatpush1.bf16.msra.mxu0 0
    %130 = vmatprep.subr.bf16.mxu0 0
    %131 = vmatpush1.bf16.msra.mxu0 0
    %132 = vmatprep.subr.bf16.mxu0 0
    %133 = vmatpush1.bf16.msra.mxu0 0
    %134 = vmatprep.subr.bf16.mxu0 0
    %135 = vmatpush1.bf16.msra.mxu0 0
    %136 = vmatprep.mubr.bf16.mxu0 0
    %137 = vmatmul.mubr.bf16.gmra.mrb[0].mxu0 %v102
    %v138 = vpop.f32.mrb[0].mxu0
    %v139 = vadd.f32 0.0, %v138
    %v140 = vpop.f32.mrb[0].mxu0
    %v141 = vpop.f32.mrb[0].mxu0
    %v142 = vpop.f32.mrb[0].mxu0
    %143 = vdwg.mxu0
    %v144 = vadd.f32 %v83, %v139
    %v145 = vxor.u32 %v144, 2147483648
    %v146 = vmul.f32 %v145, 1.442695
    %v147 = vpow.pop %v146
    %v148 = vadd.f32 %v147, 1.0
    %v149 = vrcp.pop %v148
    %v150 = vmul.f32 1.0, %v149
    %v151 = vtanh.pop %v144
    %v152 = vmul.f32 %v150, 0.0
    %154 = vrot.lane.b32.xlu0 %v151, 32
    %v155 = vpop.permute.xlu0 %154
    %v157 = vmul.f32 %v150, %v155
    %159 = vrot.lane.b32.xlu0 %v157, 32
    %v160 = vpop.permute.xlu0 %159
    %v162 = vadd.f32 %v152, %v160
    %v163 = vtanh.pop %v162
    %165 = vrot.lane.b32.xlu0 %v163, 32
    %v166 = vpop.permute.xlu0 %165
    %v168 = vmul.f32 %v150, %v166
    %v169 = vld [vmem:[%s4] sm:$0x1]
    %v170 = vpack.c.bf16 %v168, %v168
    %v171 = vld [vmem:[#allocation7] sm:$0xf]
    %v172 = vld [vmem:[#allocation7 + $0x4] sm:$0xf]
    %v173 = vld [vmem:[#allocation7 + $0x8] sm:$0xf]
    %v174 = vld [vmem:[#allocation7 + $0xc] sm:$0xf]
    %176 = vrot.lane.b32.xlu0 %v170, 64
    %v177 = vpop.permute.xlu0 %176
    %v182 = vunpack.c.l.b16 %v171
    %v183 = vunpack.c.l.b16 %v172
    %v184 = vunpack.c.l.b16 %v173
    %v185 = vunpack.c.l.b16 %v174
    %v186 = vpack.c.b16 %v183, %v182
    %v187 = vpack.c.b16 %v185, %v184
    %v191 = vsel %vm100, %v177, 0
    %193 = vmatprep.subr.bf16.mxu0 0
    %194 = vmatpush1.bf16.msra.mxu0 %v186
    %195 = vmatprep.subr.bf16.mxu0 0
    %196 = vmatpush1.bf16.msra.mxu0 %v187
    %197 = vmatprep.subr.bf16.mxu0 0
    %198 = vmatpush1.bf16.msra.mxu0 0
    %199 = vmatprep.subr.bf16.mxu0 0
    %200 = vmatpush1.bf16.msra.mxu0 0
    %201 = vmatprep.subr.bf16.mxu0 0
    %202 = vmatpush1.bf16.msra.mxu0 0
    %203 = vmatprep.subr.bf16.mxu0 0
    %204 = vmatpush1.bf16.msra.mxu0 0
    %205 = vmatprep.subr.bf16.mxu0 0
    %206 = vmatpush1.bf16.msra.mxu0 0
    %207 = vmatprep.subr.bf16.mxu0 0
    %208 = vmatpush1.bf16.msra.mxu0 0
    %209 = vmatprep.subr.bf16.mxu0 0
    %210 = vmatpush1.bf16.msra.mxu0 0
    %211 = vmatprep.subr.bf16.mxu0 0
    %212 = vmatpush1.bf16.msra.mxu0 0
    %213 = vmatprep.subr.bf16.mxu0 0
    %214 = vmatpush1.bf16.msra.mxu0 0
    %215 = vmatprep.subr.bf16.mxu0 0
    %216 = vmatpush1.bf16.msra.mxu0 0
    %217 = vmatprep.subr.bf16.mxu0 0
    %218 = vmatpush1.bf16.msra.mxu0 0
    %219 = vmatprep.subr.bf16.mxu0 0
    %220 = vmatpush1.bf16.msra.mxu0 0
    %221 = vmatprep.subr.bf16.mxu0 0
    %222 = vmatpush1.bf16.msra.mxu0 0
    %223 = vmatprep.subr.bf16.mxu0 0
    %224 = vmatpush1.bf16.msra.mxu0 0
    %225 = vmatprep.mubr.bf16.mxu0 0
    %226 = vmatmul.mubr.bf16.gmra.mrb[0].mxu0 %v191
    %v227 = vpop.f32.mrb[0].mxu0
    %v228 = vadd.f32 0.0, %v227
    %v229 = vpop.f32.mrb[0].mxu0
    %v230 = vpop.f32.mrb[0].mxu0
    %v231 = vpop.f32.mrb[0].mxu0
    %232 = vdwg.mxu0
    %v234 = vlaneseq
    %v235 = vshrl.u32 %v234, 7
    %v236 = vsub.s32 0, %v235
    %v237 = vrot.slane %v169, %v236
    %v239 = vadd.f32 %v237, %v228
    %v240 = vld [vmem:[#allocation8] sm:$0xf]
    %v241 = vld [vmem:[#allocation8 + $0x4] sm:$0xf]
    %v242 = vld [vmem:[#allocation8 + $0x8] sm:$0xf]
    %v243 = vld [vmem:[#allocation8 + $0xc] sm:$0xf]
    %v248 = vunpack.c.l.b16 %v240
    %v249 = vunpack.c.l.b16 %v241
    %v250 = vunpack.c.l.b16 %v242
    %v251 = vunpack.c.l.b16 %v243
    %v252 = vpack.c.b16 %v249, %v248
    %v253 = vpack.c.b16 %v251, %v250
    %256 = vmatprep.subr.bf16.mxu0 0
    %257 = vmatpush1.bf16.msra.mxu0 %v252
    %258 = vmatprep.subr.bf16.mxu0 0
    %259 = vmatpush1.bf16.msra.mxu0 %v253
    %260 = vmatprep.subr.bf16.mxu0 0
    %261 = vmatpush1.bf16.msra.mxu0 0
    %262 = vmatprep.subr.bf16.mxu0 0
    %263 = vmatpush1.bf16.msra.mxu0 0
    %264 = vmatprep.subr.bf16.mxu0 0
    %265 = vmatpush1.bf16.msra.mxu0 0
    %266 = vmatprep.subr.bf16.mxu0 0
    %267 = vmatpush1.bf16.msra.mxu0 0
    %268 = vmatprep.subr.bf16.mxu0 0
    %269 = vmatpush1.bf16.msra.mxu0 0
    %270 = vmatprep.subr.bf16.mxu0 0
    %271 = vmatpush1.bf16.msra.mxu0 0
    %272 = vmatprep.subr.bf16.mxu0 0
    %273 = vmatpush1.bf16.msra.mxu0 0
    %274 = vmatprep.subr.bf16.mxu0 0
    %275 = vmatpush1.bf16.msra.mxu0 0
    %276 = vmatprep.subr.bf16.mxu0 0
    %277 = vmatpush1.bf16.msra.mxu0 0
    %278 = vmatprep.subr.bf16.mxu0 0
    %279 = vmatpush1.bf16.msra.mxu0 0
    %280 = vmatprep.subr.bf16.mxu0 0
    %281 = vmatpush1.bf16.msra.mxu0 0
    %282 = vmatprep.subr.bf16.mxu0 0
    %283 = vmatpush1.bf16.msra.mxu0 0
    %284 = vmatprep.subr.bf16.mxu0 0
    %285 = vmatpush1.bf16.msra.mxu0 0
    %286 = vmatprep.subr.bf16.mxu0 0
    %287 = vmatpush1.bf16.msra.mxu0 0
    %288 = vmatprep.mubr.bf16.mxu0 0
    %289 = vmatmul.mubr.bf16.gmra.mrb[0].mxu0 %v102
    %v290 = vpop.f32.mrb[0].mxu0
    %v291 = vadd.f32 0.0, %v290
    %v292 = vpop.f32.mrb[0].mxu0
    %v293 = vpop.f32.mrb[0].mxu0
    %v294 = vpop.f32.mrb[0].mxu0
    %295 = vdwg.mxu0
    %v296 = vadd.f32 %v239, %v291
    %v297 = vxor.u32 %v296, 2147483648
    %v298 = vmul.f32 %v297, 1.442695
    %v299 = vpow.pop %v298
    %v300 = vadd.f32 %v299, 1.0
    %v301 = vrcp.pop %v300
    %v302 = vmul.f32 1.0, %v301
    %v303 = vtanh.pop %v296
    %v304 = vmul.f32 %v302, 0.0
    %306 = vrot.lane.b32.xlu0 %v303, 32
    %v307 = vpop.permute.xlu0 %306
    %v309 = vmul.f32 %v302, %v307
    %311 = vrot.lane.b32.xlu0 %v309, 32
    %v312 = vpop.permute.xlu0 %311
    %v314 = vadd.f32 %v304, %v312
    %v315 = vtanh.pop %v314
    %317 = vrot.lane.b32.xlu0 %v315, 32
    %v318 = vpop.permute.xlu0 %317
    %v320 = vmul.f32 %v302, %v318
    %s321 = scalar_lea.vmem [#allocation2], 2
    %v322 = vld [vmem:[%s321] sm:$0x3]
    %323 = vmatprep.subr.bf16.mxu0 0
    %324 = vmatpush1.bf16.msra.mxu0 %v96
    %325 = vmatprep.subr.bf16.mxu0 0
    %326 = vmatpush1.bf16.msra.mxu0 %v97
    %327 = vmatprep.subr.bf16.mxu0 0
    %328 = vmatpush1.bf16.msra.mxu0 0
    %329 = vmatprep.subr.bf16.mxu0 0
    %330 = vmatpush1.bf16.msra.mxu0 0
    %331 = vmatprep.subr.bf16.mxu0 0
    %332 = vmatpush1.bf16.msra.mxu0 0
    %333 = vmatprep.subr.bf16.mxu0 0
    %334 = vmatpush1.bf16.msra.mxu0 0
    %335 = vmatprep.subr.bf16.mxu0 0
    %336 = vmatpush1.bf16.msra.mxu0 0
    %337 = vmatprep.subr.bf16.mxu0 0
    %338 = vmatpush1.bf16.msra.mxu0 0
    %339 = vmatprep.subr.bf16.mxu0 0
    %340 = vmatpush1.bf16.msra.mxu0 0
    %341 = vmatprep.subr.bf16.mxu0 0
    %342 = vmatpush1.bf16.msra.mxu0 0
    %343 = vmatprep.subr.bf16.mxu0 0
    %344 = vmatpush1.bf16.msra.mxu0 0
    %345 = vmatprep.subr.bf16.mxu0 0
    %346 = vmatpush1.bf16.msra.mxu0 0
    %347 = vmatprep.subr.bf16.mxu0 0
    %348 = vmatpush1.bf16.msra.mxu0 0
    %349 = vmatprep.subr.bf16.mxu0 0
    %350 = vmatpush1.bf16.msra.mxu0 0
    %351 = vmatprep.subr.bf16.mxu0 0
    %352 = vmatpush1.bf16.msra.mxu0 0
    %353 = vmatprep.subr.bf16.mxu0 0
    %354 = vmatpush1.bf16.msra.mxu0 0
    %355 = vmatprep.mubr.bf16.mxu0 0
    %356 = vmatmul.mubr.bf16.gmra.mrb[0].mxu0 %v191
    %v357 = vpop.f32.mrb[0].mxu0
    %v358 = vadd.f32 0.0, %v357
    %v359 = vpop.f32.mrb[0].mxu0
    %v360 = vpop.f32.mrb[0].mxu0
    %v361 = vpop.f32.mrb[0].mxu0
    %362 = vdwg.mxu0
    %v363 = vadd.f32 %v322, %v358
    %v364 = vxor.u32 %v363, 2147483648
    %v365 = vmul.f32 %v364, 1.442695
    %v366 = vpow.pop %v365
    %v367 = vadd.f32 %v366, 1.0
    %v368 = vrcp.pop %v367
    %v369 = vmul.f32 1.0, %v368
    %v370 = vtanh.pop %v363
    %v371 = vmul.f32 %v369, %v162
    %373 = vrot.lane.b32.xlu0 %v370, 32
    %v374 = vpop.permute.xlu0 %373
    %v376 = vmul.f32 %v369, %v374
    %378 = vrot.lane.b32.xlu0 %v376, 32
    %v379 = vpop.permute.xlu0 %378
    %v381 = vadd.f32 %v371, %v379
    %v382 = vtanh.pop %v381
    %384 = vrot.lane.b32.xlu0 %v382, 32
    %v385 = vpop.permute.xlu0 %384
    %v387 = vmul.f32 %v369, %v385
    %v388 = vpack.c.bf16 %v387, %v387
    %390 = vrot.lane.b32.xlu0 %v388, 64
    %v391 = vpop.permute.xlu0 %390
    %v393 = vsel %vm100, %v391, 0
    %395 = vmatprep.subr.bf16.mxu0 0
    %396 = vmatpush1.bf16.msra.mxu0 %v186
    %397 = vmatprep.subr.bf16.mxu0 0
    %398 = vmatpush1.bf16.msra.mxu0 %v187
    %399 = vmatprep.subr.bf16.mxu0 0
    %400 = vmatpush1.bf16.msra.mxu0 0
    %401 = vmatprep.subr.bf16.mxu0 0
    %402 = vmatpush1.bf16.msra.mxu0 0
    %403 = vmatprep.subr.bf16.mxu0 0
    %404 = vmatpush1.bf16.msra.mxu0 0
    %405 = vmatprep.subr.bf16.mxu0 0
    %406 = vmatpush1.bf16.msra.mxu0 0
    %407 = vmatprep.subr.bf16.mxu0 0
    %408 = vmatpush1.bf16.msra.mxu0 0
    %409 = vmatprep.subr.bf16.mxu0 0
    %410 = vmatpush1.bf16.msra.mxu0 0
    %411 = vmatprep.subr.bf16.mxu0 0
    %412 = vmatpush1.bf16.msra.mxu0 0
    %413 = vmatprep.subr.bf16.mxu0 0
    %414 = vmatpush1.bf16.msra.mxu0 0
    %415 = vmatprep.subr.bf16.mxu0 0
    %416 = vmatpush1.bf16.msra.mxu0 0
    %417 = vmatprep.subr.bf16.mxu0 0
    %418 = vmatpush1.bf16.msra.mxu0 0
    %419 = vmatprep.subr.bf16.mxu0 0
    %420 = vmatpush1.bf16.msra.mxu0 0
    %421 = vmatprep.subr.bf16.mxu0 0
    %422 = vmatpush1.bf16.msra.mxu0 0
    %423 = vmatprep.subr.bf16.mxu0 0
    %424 = vmatpush1.bf16.msra.mxu0 0
    %425 = vmatprep.subr.bf16.mxu0 0
    %426 = vmatpush1.bf16.msra.mxu0 0
    %427 = vmatprep.mubr.bf16.mxu0 0
    %428 = vmatmul.mubr.bf16.gmra.mrb[0].mxu0 %v393
    %v429 = vpop.f32.mrb[0].mxu0
    %v430 = vadd.f32 0.0, %v429
    %v431 = vpop.f32.mrb[0].mxu0
    %v432 = vpop.f32.mrb[0].mxu0
    %v433 = vpop.f32.mrb[0].mxu0
    %434 = vdwg.mxu0
    %v435 = vadd.f32 %v237, %v430
    %v436 = vpack.c.bf16 %v320, %v320
    %438 = vrot.lane.b32.xlu0 %v436, 64
    %v439 = vpop.permute.xlu0 %438
    %v441 = vsel %vm100, %v439, 0
    %443 = vmatprep.subr.bf16.mxu0 0
    %444 = vmatpush1.bf16.msra.mxu0 %v252
    %445 = vmatprep.subr.bf16.mxu0 0
    %446 = vmatpush1.bf16.msra.mxu0 %v253
    %447 = vmatprep.subr.bf16.mxu0 0
    %448 = vmatpush1.bf16.msra.mxu0 0
    %449 = vmatprep.subr.bf16.mxu0 0
    %450 = vmatpush1.bf16.msra.mxu0 0
    %451 = vmatprep.subr.bf16.mxu0 0
    %452 = vmatpush1.bf16.msra.mxu0 0
    %453 = vmatprep.subr.bf16.mxu0 0
    %454 = vmatpush1.bf16.msra.mxu0 0
    %455 = vmatprep.subr.bf16.mxu0 0
    %456 = vmatpush1.bf16.msra.mxu0 0
    %457 = vmatprep.subr.bf16.mxu0 0
    %458 = vmatpush1.bf16.msra.mxu0 0
    %459 = vmatprep.subr.bf16.mxu0 0
    %460 = vmatpush1.bf16.msra.mxu0 0
    %461 = vmatprep.subr.bf16.mxu0 0
    %462 = vmatpush1.bf16.msra.mxu0 0
    %463 = vmatprep.subr.bf16.mxu0 0
    %464 = vmatpush1.bf16.msra.mxu0 0
    %465 = vmatprep.subr.bf16.mxu0 0
    %466 = vmatpush1.bf16.msra.mxu0 0
    %467 = vmatprep.subr.bf16.mxu0 0
    %468 = vmatpush1.bf16.msra.mxu0 0
    %469 = vmatprep.subr.bf16.mxu0 0
    %470 = vmatpush1.bf16.msra.mxu0 0
    %471 = vmatprep.subr.bf16.mxu0 0
    %472 = vmatpush1.bf16.msra.mxu0 0
    %473 = vmatprep.subr.bf16.mxu0 0
    %474 = vmatpush1.bf16.msra.mxu0 0
    %475 = vmatprep.mubr.bf16.mxu0 0
    %476 = vmatmul.mubr.bf16.gmra.mrb[0].mxu0 %v441
    %v477 = vpop.f32.mrb[0].mxu0
    %v478 = vadd.f32 0.0, %v477
    %v479 = vpop.f32.mrb[0].mxu0
    %v480 = vpop.f32.mrb[0].mxu0
    %v481 = vpop.f32.mrb[0].mxu0
    %482 = vdwg.mxu0
    %v483 = vadd.f32 %v435, %v478
    %v484 = vxor.u32 %v483, 2147483648
    %v485 = vmul.f32 %v484, 1.442695
    %v486 = vpow.pop %v485
    %v487 = vadd.f32 %v486, 1.0
    %v488 = vrcp.pop %v487
    %v489 = vmul.f32 1.0, %v488
    %v490 = vtanh.pop %v483
    %v491 = vmul.f32 %v489, %v314
    %493 = vrot.lane.b32.xlu0 %v490, 32
    %v494 = vpop.permute.xlu0 %493
    %v496 = vmul.f32 %v489, %v494
    %498 = vrot.lane.b32.xlu0 %v496, 32
    %v499 = vpop.permute.xlu0 %498
    %v501 = vadd.f32 %v491, %v499
    %v502 = vtanh.pop %v501
    %504 = vrot.lane.b32.xlu0 %v502, 32
    %v505 = vpop.permute.xlu0 %504
    %v507 = vmul.f32 %v489, %v505
    %s508 = scalar_lea.vmem [#allocation2], 4
    %v509 = vld [vmem:[%s508] sm:$0x3]
    %510 = vmatprep.subr.bf16.mxu0 0
    %511 = vmatpush1.bf16.msra.mxu0 %v96
    %512 = vmatprep.subr.bf16.mxu0 0
    %513 = vmatpush1.bf16.msra.mxu0 %v97
    %514 = vmatprep.subr.bf16.mxu0 0
    %515 = vmatpush1.bf16.msra.mxu0 0
    %516 = vmatprep.subr.bf16.mxu0 0
    %517 = vmatpush1.bf16.msra.mxu0 0
    %518 = vmatprep.subr.bf16.mxu0 0
    %519 = vmatpush1.bf16.msra.mxu0 0
    %520 = vmatprep.subr.bf16.mxu0 0
    %521 = vmatpush1.bf16.msra.mxu0 0
    %522 = vmatprep.subr.bf16.mxu0 0
    %523 = vmatpush1.bf16.msra.mxu0 0
    %524 = vmatprep.subr.bf16.mxu0 0
    %525 = vmatpush1.bf16.msra.mxu0 0
    %526 = vmatprep.subr.bf16.mxu0 0
    %527 = vmatpush1.bf16.msra.mxu0 0
    %528 = vmatprep.subr.bf16.mxu0 0
    %529 = vmatpush1.bf16.msra.mxu0 0
    %530 = vmatprep.subr.bf16.mxu0 0
    %531 = vmatpush1.bf16.msra.mxu0 0
    %532 = vmatprep.subr.bf16.mxu0 0
    %533 = vmatpush1.bf16.msra.mxu0 0
    %534 = vmatprep.subr.bf16.mxu0 0
    %535 = vmatpush1.bf16.msra.mxu0 0
    %536 = vmatprep.subr.bf16.mxu0 0
    %537 = vmatpush1.bf16.msra.mxu0 0
    %538 = vmatprep.subr.bf16.mxu0 0
    %539 = vmatpush1.bf16.msra.mxu0 0
    %540 = vmatprep.subr.bf16.mxu0 0
    %541 = vmatpush1.bf16.msra.mxu0 0
    %542 = vmatprep.mubr.bf16.mxu0 0
    %543 = vmatmul.mubr.bf16.gmra.mrb[0].mxu0 %v393
    %v544 = vpop.f32.mrb[0].mxu0
    %v545 = vadd.f32 0.0, %v544
    %v546 = vpop.f32.mrb[0].mxu0
    %v547 = vpop.f32.mrb[0].mxu0
    %v548 = vpop.f32.mrb[0].mxu0
    %549 = vdwg.mxu0
    %v550 = vadd.f32 %v509, %v545
    %v551 = vxor.u32 %v550, 2147483648
    %v552 = vmul.f32 %v551, 1.442695
    %v553 = vpow.pop %v552
    %v554 = vadd.f32 %v553, 1.0
    %v555 = vrcp.pop %v554
    %v556 = vmul.f32 1.0, %v555
    %v557 = vtanh.pop %v550
    %v558 = vmul.f32 %v556, %v381
    %560 = vrot.lane.b32.xlu0 %v557, 32
    %v561 = vpop.permute.xlu0 %560
    %v563 = vmul.f32 %v556, %v561
    %565 = vrot.lane.b32.xlu0 %v563, 32
    %v566 = vpop.permute.xlu0 %565
    %v568 = vadd.f32 %v558, %v566
    %v569 = vtanh.pop %v568
    %571 = vrot.lane.b32.xlu0 %v569, 32
    %v572 = vpop.permute.xlu0 %571
    %v574 = vmul.f32 %v556, %v572
    %v575 = vpack.c.bf16 %v574, %v574
    %577 = vrot.lane.b32.xlu0 %v575, 64
    %v578 = vpop.permute.xlu0 %577
    %v580 = vsel %vm100, %v578, 0
    %582 = vmatprep.subr.bf16.mxu0 0
    %583 = vmatpush1.bf16.msra.mxu0 %v186
    %584 = vmatprep.subr.bf16.mxu0 0
    %585 = vmatpush1.bf16.msra.mxu0 %v187
    %586 = vmatprep.subr.bf16.mxu0 0
    %587 = vmatpush1.bf16.msra.mxu0 0
    %588 = vmatprep.subr.bf16.mxu0 0
    %589 = vmatpush1.bf16.msra.mxu0 0
    %590 = vmatprep.subr.bf16.mxu0 0
    %591 = vmatpush1.bf16.msra.mxu0 0
    %592 = vmatprep.subr.bf16.mxu0 0
    %593 = vmatpush1.bf16.msra.mxu0 0
    %594 = vmatprep.subr.bf16.mxu0 0
    %595 = vmatpush1.bf16.msra.mxu0 0
    %596 = vmatprep.subr.bf16.mxu0 0
    %597 = vmatpush1.bf16.msra.mxu0 0
    %598 = vmatprep.subr.bf16.mxu0 0
    %599 = vmatpush1.bf16.msra.mxu0 0
    %600 = vmatprep.subr.bf16.mxu0 0
    %601 = vmatpush1.bf16.msra.mxu0 0
    %602 = vmatprep.subr.bf16.mxu0 0
    %603 = vmatpush1.bf16.msra.mxu0 0
    %604 = vmatprep.subr.bf16.mxu0 0
    %605 = vmatpush1.bf16.msra.mxu0 0
    %606 = vmatprep.subr.bf16.mxu0 0
    %607 = vmatpush1.bf16.msra.mxu0 0
    %608 = vmatprep.subr.bf16.mxu0 0
    %609 = vmatpush1.bf16.msra.mxu0 0
    %610 = vmatprep.subr.bf16.mxu0 0
    %611 = vmatpush1.bf16.msra.mxu0 0
    %612 = vmatprep.subr.bf16.mxu0 0
    %613 = vmatpush1.bf16.msra.mxu0 0
    %614 = vmatprep.mubr.bf16.mxu0 0
    %615 = vmatmul.mubr.bf16.gmra.mrb[0].mxu0 %v580
    %v616 = vpop.f32.mrb[0].mxu0
    %v617 = vadd.f32 0.0, %v616
    %v618 = vpop.f32.mrb[0].mxu0
    %v619 = vpop.f32.mrb[0].mxu0
    %v620 = vpop.f32.mrb[0].mxu0
    %621 = vdwg.mxu0
    %v622 = vadd.f32 %v237, %v617
    %v623 = vpack.c.bf16 %v507, %v507
    %625 = vrot.lane.b32.xlu0 %v623, 64
    %v626 = vpop.permute.xlu0 %625
    %v628 = vsel %vm100, %v626, 0
    %630 = vmatprep.subr.bf16.mxu0 0
    %631 = vmatpush1.bf16.msra.mxu0 %v252
    %632 = vmatprep.subr.bf16.mxu0 0
    %633 = vmatpush1.bf16.msra.mxu0 %v253
    %634 = vmatprep.subr.bf16.mxu0 0
    %635 = vmatpush1.bf16.msra.mxu0 0
    %636 = vmatprep.subr.bf16.mxu0 0
    %637 = vmatpush1.bf16.msra.mxu0 0
    %638 = vmatprep.subr.bf16.mxu0 0
    %639 = vmatpush1.bf16.msra.mxu0 0
    %640 = vmatprep.subr.bf16.mxu0 0
    %641 = vmatpush1.bf16.msra.mxu0 0
    %642 = vmatprep.subr.bf16.mxu0 0
    %643 = vmatpush1.bf16.msra.mxu0 0
    %644 = vmatprep.subr.bf16.mxu0 0
    %645 = vmatpush1.bf16.msra.mxu0 0
    %646 = vmatprep.subr.bf16.mxu0 0
    %647 = vmatpush1.bf16.msra.mxu0 0
    %648 = vmatprep.subr.bf16.mxu0 0
    %649 = vmatpush1.bf16.msra.mxu0 0
    %650 = vmatprep.subr.bf16.mxu0 0
    %651 = vmatpush1.bf16.msra.mxu0 0
    %652 = vmatprep.subr.bf16.mxu0 0
    %653 = vmatpush1.bf16.msra.mxu0 0
    %654 = vmatprep.subr.bf16.mxu0 0
    %655 = vmatpush1.bf16.msra.mxu0 0
    %656 = vmatprep.subr.bf16.mxu0 0
    %657 = vmatpush1.bf16.msra.mxu0 0
    %658 = vmatprep.subr.bf16.mxu0 0
    %659 = vmatpush1.bf16.msra.mxu0 0
    %660 = vmatprep.subr.bf16.mxu0 0
    %661 = vmatpush1.bf16.msra.mxu0 0
    %662 = vmatprep.mubr.bf16.mxu0 0
    %663 = vmatmul.mubr.bf16.gmra.mrb[0].mxu0 %v628
    %v664 = vpop.f32.mrb[0].mxu0
    %v665 = vadd.f32 0.0, %v664
    %v666 = vpop.f32.mrb[0].mxu0
    %v667 = vpop.f32.mrb[0].mxu0
    %v668 = vpop.f32.mrb[0].mxu0
    %669 = vdwg.mxu0
    %v670 = vadd.f32 %v622, %v665
    %v671 = vxor.u32 %v670, 2147483648
    %v672 = vmul.f32 %v671, 1.442695
    %v673 = vpow.pop %v672
    %v674 = vadd.f32 %v673, 1.0
    %v675 = vrcp.pop %v674
    %v676 = vmul.f32 1.0, %v675
    %v677 = vtanh.pop %v670
    %v678 = vmul.f32 %v676, %v501
    %680 = vrot.lane.b32.xlu0 %v677, 32
    %v681 = vpop.permute.xlu0 %680
    %v683 = vmul.f32 %v676, %v681
    %685 = vrot.lane.b32.xlu0 %v683, 32
    %v686 = vpop.permute.xlu0 %685
    %v688 = vadd.f32 %v678, %v686
    %v689 = vtanh.pop %v688
    %691 = vrot.lane.b32.xlu0 %v689, 32
    %v692 = vpop.permute.xlu0 %691
    %v694 = vmul.f32 %v676, %v692
    %s695 = scalar_lea.vmem [#allocation2], 6
    %v696 = vld [vmem:[%s695] sm:$0x3]
    %697 = vmatprep.subr.bf16.mxu0 0
    %698 = vmatpush1.bf16.msra.mxu0 %v96
    %699 = vmatprep.subr.bf16.mxu0 0
    %700 = vmatpush1.bf16.msra.mxu0 %v97
    %701 = vmatprep.subr.bf16.mxu0 0
    %702 = vmatpush1.bf16.msra.mxu0 0
    %703 = vmatprep.subr.bf16.mxu0 0
    %704 = vmatpush1.bf16.msra.mxu0 0
    %705 = vmatprep.subr.bf16.mxu0 0
    %706 = vmatpush1.bf16.msra.mxu0 0
    %707 = vmatprep.subr.bf16.mxu0 0
    %708 = vmatpush1.bf16.msra.mxu0 0
    %709 = vmatprep.subr.bf16.mxu0 0
    %710 = vmatpush1.bf16.msra.mxu0 0
    %711 = vmatprep.subr.bf16.mxu0 0
    %712 = vmatpush1.bf16.msra.mxu0 0
    %713 = vmatprep.subr.bf16.mxu0 0
    %714 = vmatpush1.bf16.msra.mxu0 0
    %715 = vmatprep.subr.bf16.mxu0 0
    %716 = vmatpush1.bf16.msra.mxu0 0
    %717 = vmatprep.subr.bf16.mxu0 0
    %718 = vmatpush1.bf16.msra.mxu0 0
    %719 = vmatprep.subr.bf16.mxu0 0
    %720 = vmatpush1.bf16.msra.mxu0 0
    %721 = vmatprep.subr.bf16.mxu0 0
    %722 = vmatpush1.bf16.msra.mxu0 0
    %723 = vmatprep.subr.bf16.mxu0 0
    %724 = vmatpush1.bf16.msra.mxu0 0
    %725 = vmatprep.subr.bf16.mxu0 0
    %726 = vmatpush1.bf16.msra.mxu0 0
    %727 = vmatprep.subr.bf16.mxu0 0
    %728 = vmatpush1.bf16.msra.mxu0 0
    %729 = vmatprep.mubr.bf16.mxu0 0
    %730 = vmatmul.mubr.bf16.gmra.mrb[0].mxu0 %v580
    %v731 = vpop.f32.mrb[0].mxu0
    %v732 = vadd.f32 0.0, %v731
    %v733 = vpop.f32.mrb[0].mxu0
    %v734 = vpop.f32.mrb[0].mxu0
    %v735 = vpop.f32.mrb[0].mxu0
    %736 = vdwg.mxu0
    %v737 = vadd.f32 %v696, %v732
    %v738 = vxor.u32 %v737, 2147483648
    %v739 = vmul.f32 %v738, 1.442695
    %v740 = vpow.pop %v739
    %v741 = vadd.f32 %v740, 1.0
    %v742 = vrcp.pop %v741
    %v743 = vmul.f32 1.0, %v742
    %v744 = vtanh.pop %v737
    %v745 = vmul.f32 %v743, %v568
    %747 = vrot.lane.b32.xlu0 %v744, 32
    %v748 = vpop.permute.xlu0 %747
    %v750 = vmul.f32 %v743, %v748
    %752 = vrot.lane.b32.xlu0 %v750, 32
    %v753 = vpop.permute.xlu0 %752
    %v755 = vadd.f32 %v745, %v753
    %v756 = vtanh.pop %v755
    %758 = vrot.lane.b32.xlu0 %v756, 32
    %v759 = vpop.permute.xlu0 %758
    %v761 = vmul.f32 %v743, %v759
    %v762 = vpack.c.bf16 %v761, %v761
    %764 = vrot.lane.b32.xlu0 %v762, 64
    %v765 = vpop.permute.xlu0 %764
    %v767 = vsel %vm100, %v765, 0
    %769 = vmatprep.subr.bf16.mxu0 0
    %770 = vmatpush1.bf16.msra.mxu0 %v186
    %771 = vmatprep.subr.bf16.mxu0 0
    %772 = vmatpush1.bf16.msra.mxu0 %v187
    %773 = vmatprep.subr.bf16.mxu0 0
    %774 = vmatpush1.bf16.msra.mxu0 0
    %775 = vmatprep.subr.bf16.mxu0 0
    %776 = vmatpush1.bf16.msra.mxu0 0
    %777 = vmatprep.subr.bf16.mxu0 0
    %778 = vmatpush1.bf16.msra.mxu0 0
    %779 = vmatprep.subr.bf16.mxu0 0
    %780 = vmatpush1.bf16.msra.mxu0 0
    %781 = vmatprep.subr.bf16.mxu0 0
    %782 = vmatpush1.bf16.msra.mxu0 0
    %783 = vmatprep.subr.bf16.mxu0 0
    %784 = vmatpush1.bf16.msra.mxu0 0
    %785 = vmatprep.subr.bf16.mxu0 0
    %786 = vmatpush1.bf16.msra.mxu0 0
    %787 = vmatprep.subr.bf16.mxu0 0
    %788 = vmatpush1.bf16.msra.mxu0 0
    %789 = vmatprep.subr.bf16.mxu0 0
    %790 = vmatpush1.bf16.msra.mxu0 0
    %791 = vmatprep.subr.bf16.mxu0 0
    %792 = vmatpush1.bf16.msra.mxu0 0
    %793 = vmatprep.subr.bf16.mxu0 0
    %794 = vmatpush1.bf16.msra.mxu0 0
    %795 = vmatprep.subr.bf16.mxu0 0
    %796 = vmatpush1.bf16.msra.mxu0 0
    %797 = vmatprep.subr.bf16.mxu0 0
    %798 = vmatpush1.bf16.msra.mxu0 0
    %799 = vmatprep.subr.bf16.mxu0 0
    %800 = vmatpush1.bf16.msra.mxu0 0
    %801 = vmatprep.mubr.bf16.mxu0 0
    %802 = vmatmul.mubr.bf16.gmra.mrb[0].mxu0 %v767
    %v803 = vpop.f32.mrb[0].mxu0
    %v804 = vadd.f32 0.0, %v803
    %v805 = vpop.f32.mrb[0].mxu0
    %v806 = vpop.f32.mrb[0].mxu0
    %v807 = vpop.f32.mrb[0].mxu0
    %808 = vdwg.mxu0
    %v809 = vadd.f32 %v237, %v804
    %v810 = vpack.c.bf16 %v694, %v694
    %812 = vrot.lane.b32.xlu0 %v810, 64
    %v813 = vpop.permute.xlu0 %812
    %v815 = vsel %vm100, %v813, 0
    %817 = vmatprep.subr.bf16.mxu0 0
    %818 = vmatpush1.bf16.msra.mxu0 %v252
    %819 = vmatprep.subr.bf16.mxu0 0
    %820 = vmatpush1.bf16.msra.mxu0 %v253
    %821 = vmatprep.subr.bf16.mxu0 0
    %822 = vmatpush1.bf16.msra.mxu0 0
    %823 = vmatprep.subr.bf16.mxu0 0
    %824 = vmatpush1.bf16.msra.mxu0 0
    %825 = vmatprep.subr.bf16.mxu0 0
    %826 = vmatpush1.bf16.msra.mxu0 0
    %827 = vmatprep.subr.bf16.mxu0 0
    %828 = vmatpush1.bf16.msra.mxu0 0
    %829 = vmatprep.subr.bf16.mxu0 0
    %830 = vmatpush1.bf16.msra.mxu0 0
    %831 = vmatprep.subr.bf16.mxu0 0
    %832 = vmatpush1.bf16.msra.mxu0 0
    %833 = vmatprep.subr.bf16.mxu0 0
    %834 = vmatpush1.bf16.msra.mxu0 0
    %835 = vmatprep.subr.bf16.mxu0 0
    %836 = vmatpush1.bf16.msra.mxu0 0
    %837 = vmatprep.subr.bf16.mxu0 0
    %838 = vmatpush1.bf16.msra.mxu0 0
    %839 = vmatprep.subr.bf16.mxu0 0
    %840 = vmatpush1.bf16.msra.mxu0 0
    %841 = vmatprep.subr.bf16.mxu0 0
    %842 = vmatpush1.bf16.msra.mxu0 0
    %843 = vmatprep.subr.bf16.mxu0 0
    %844 = vmatpush1.bf16.msra.mxu0 0
    %845 = vmatprep.subr.bf16.mxu0 0
    %846 = vmatpush1.bf16.msra.mxu0 0
    %847 = vmatprep.subr.bf16.mxu0 0
    %848 = vmatpush1.bf16.msra.mxu0 0
    %849 = vmatprep.mubr.bf16.mxu0 0
    %850 = vmatmul.mubr.bf16.gmra.mrb[0].mxu0 %v815
    %v851 = vpop.f32.mrb[0].mxu0
    %v852 = vadd.f32 0.0, %v851
    %v853 = vpop.f32.mrb[0].mxu0
    %v854 = vpop.f32.mrb[0].mxu0
    %v855 = vpop.f32.mrb[0].mxu0
    %856 = vdwg.mxu0
    %v857 = vadd.f32 %v809, %v852
    %v858 = vxor.u32 %v857, 2147483648
    %v859 = vmul.f32 %v858, 1.442695
    %v860 = vpow.pop %v859
    %v861 = vadd.f32 %v860, 1.0
    %v862 = vrcp.pop %v861
    %v863 = vmul.f32 1.0, %v862
    %v864 = vtanh.pop %v857
    %v865 = vmul.f32 %v863, %v688
    %867 = vrot.lane.b32.xlu0 %v864, 32
    %v868 = vpop.permute.xlu0 %867
    %v870 = vmul.f32 %v863, %v868
    %872 = vrot.lane.b32.xlu0 %v870, 32
    %v873 = vpop.permute.xlu0 %872
    %v875 = vadd.f32 %v865, %v873
    %v876 = vtanh.pop %v875
    %878 = vrot.lane.b32.xlu0 %v876, 32
    %v879 = vpop.permute.xlu0 %878
    %v881 = vmul.f32 %v863, %v879
    %s882 = scalar_lea.vmem [#allocation2], 8
    %v883 = vld [vmem:[%s882] sm:$0x3]
    %884 = vmatprep.subr.bf16.mxu0 0
    %885 = vmatpush1.bf16.msra.mxu0 %v96
    %886 = vmatprep.subr.bf16.mxu0 0
    %887 = vmatpush1.bf16.msra.mxu0 %v97
    %888 = vmatprep.subr.bf16.mxu0 0
    %889 = vmatpush1.bf16.msra.mxu0 0
    %890 = vmatprep.subr.bf16.mxu0 0
    %891 = vmatpush1.bf16.msra.mxu0 0
    %892 = vmatprep.subr.bf16.mxu0 0
    %893 = vmatpush1.bf16.msra.mxu0 0
    %894 = vmatprep.subr.bf16.mxu0 0
    %895 = vmatpush1.bf16.msra.mxu0 0
    %896 = vmatprep.subr.bf16.mxu0 0
    %897 = vmatpush1.bf16.msra.mxu0 0
    %898 = vmatprep.subr.bf16.mxu0 0
    %899 = vmatpush1.bf16.msra.mxu0 0
    %900 = vmatprep.subr.bf16.mxu0 0
    %901 = vmatpush1.bf16.msra.mxu0 0
    %902 = vmatprep.subr.bf16.mxu0 0
    %903 = vmatpush1.bf16.msra.mxu0 0
    %904 = vmatprep.subr.bf16.mxu0 0
    %905 = vmatpush1.bf16.msra.mxu0 0
    %906 = vmatprep.subr.bf16.mxu0 0
    %907 = vmatpush1.bf16.msra.mxu0 0
    %908 = vmatprep.subr.bf16.mxu0 0
    %909 = vmatpush1.bf16.msra.mxu0 0
    %910 = vmatprep.subr.bf16.mxu0 0
    %911 = vmatpush1.bf16.msra.mxu0 0
    %912 = vmatprep.subr.bf16.mxu0 0
    %913 = vmatpush1.bf16.msra.mxu0 0
    %914 = vmatprep.subr.bf16.mxu0 0
    %915 = vmatpush1.bf16.msra.mxu0 0
    %916 = vmatprep.mubr.bf16.mxu0 0
    %917 = vmatmul.mubr.bf16.gmra.mrb[0].mxu0 %v767
    %v918 = vpop.f32.mrb[0].mxu0
    %v919 = vadd.f32 0.0, %v918
    %v920 = vpop.f32.mrb[0].mxu0
    %v921 = vpop.f32.mrb[0].mxu0
    %v922 = vpop.f32.mrb[0].mxu0
    %923 = vdwg.mxu0
    %v924 = vadd.f32 %v883, %v919
    %v925 = vxor.u32 %v924, 2147483648
    %v926 = vmul.f32 %v925, 1.442695
    %v927 = vpow.pop %v926
    %v928 = vadd.f32 %v927, 1.0
    %v929 = vrcp.pop %v928
    %v930 = vmul.f32 1.0, %v929
    %v931 = vtanh.pop %v924
    %v932 = vmul.f32 %v930, %v755
    %934 = vrot.lane.b32.xlu0 %v931, 32
    %v935 = vpop.permute.xlu0 %934
    %v937 = vmul.f32 %v930, %v935
    %939 = vrot.lane.b32.xlu0 %v937, 32
    %v940 = vpop.permute.xlu0 %939
    %v942 = vadd.f32 %v932, %v940
    %v943 = vtanh.pop %v942
    %945 = vrot.lane.b32.xlu0 %v943, 32
    %v946 = vpop.permute.xlu0 %945
    %v948 = vmul.f32 %v930, %v946
    %v949 = vpack.c.bf16 %v948, %v948
    %951 = vrot.lane.b32.xlu0 %v949, 64
    %v952 = vpop.permute.xlu0 %951
    %v954 = vsel %vm100, %v952, 0
    %956 = vmatprep.subr.bf16.mxu0 0
    %957 = vmatpush1.bf16.msra.mxu0 %v186
    %958 = vmatprep.subr.bf16.mxu0 0
    %959 = vmatpush1.bf16.msra.mxu0 %v187
    %960 = vmatprep.subr.bf16.mxu0 0
    %961 = vmatpush1.bf16.msra.mxu0 0
    %962 = vmatprep.subr.bf16.mxu0 0
    %963 = vmatpush1.bf16.msra.mxu0 0
    %964 = vmatprep.subr.bf16.mxu0 0
    %965 = vmatpush1.bf16.msra.mxu0 0
    %966 = vmatprep.subr.bf16.mxu0 0
    %967 = vmatpush1.bf16.msra.mxu0 0
    %968 = vmatprep.subr.bf16.mxu0 0
    %969 = vmatpush1.bf16.msra.mxu0 0
    %970 = vmatprep.subr.bf16.mxu0 0
    %971 = vmatpush1.bf16.msra.mxu0 0
    %972 = vmatprep.subr.bf16.mxu0 0
    %973 = vmatpush1.bf16.msra.mxu0 0
    %974 = vmatprep.subr.bf16.mxu0 0
    %975 = vmatpush1.bf16.msra.mxu0 0
    %976 = vmatprep.subr.bf16.mxu0 0
    %977 = vmatpush1.bf16.msra.mxu0 0
    %978 = vmatprep.subr.bf16.mxu0 0
    %979 = vmatpush1.bf16.msra.mxu0 0
    %980 = vmatprep.subr.bf16.mxu0 0
    %981 = vmatpush1.bf16.msra.mxu0 0
    %982 = vmatprep.subr.bf16.mxu0 0
    %983 = vmatpush1.bf16.msra.mxu0 0
    %984 = vmatprep.subr.bf16.mxu0 0
    %985 = vmatpush1.bf16.msra.mxu0 0
    %986 = vmatprep.subr.bf16.mxu0 0
    %987 = vmatpush1.bf16.msra.mxu0 0
    %988 = vmatprep.mubr.bf16.mxu0 0
    %989 = vmatmul.mubr.bf16.gmra.mrb[0].mxu0 %v954
    %v990 = vpop.f32.mrb[0].mxu0
    %v991 = vadd.f32 0.0, %v990
    %v992 = vpop.f32.mrb[0].mxu0
    %v993 = vpop.f32.mrb[0].mxu0
    %v994 = vpop.f32.mrb[0].mxu0
    %995 = vdwg.mxu0
    %v996 = vadd.f32 %v237, %v991
    %v997 = vpack.c.bf16 %v881, %v881
    %999 = vrot.lane.b32.xlu0 %v997, 64
    %v1000 = vpop.permute.xlu0 %999
    %v1002 = vsel %vm100, %v1000, 0
    %1004 = vmatprep.subr.bf16.mxu0 0
    %1005 = vmatpush1.bf16.msra.mxu0 %v252
    %1006 = vmatprep.subr.bf16.mxu0 0
    %1007 = vmatpush1.bf16.msra.mxu0 %v253
    %1008 = vmatprep.subr.bf16.mxu0 0
    %1009 = vmatpush1.bf16.msra.mxu0 0
    %1010 = vmatprep.subr.bf16.mxu0 0
    %1011 = vmatpush1.bf16.msra.mxu0 0
    %1012 = vmatprep.subr.bf16.mxu0 0
    %1013 = vmatpush1.bf16.msra.mxu0 0
    %1014 = vmatprep.subr.bf16.mxu0 0
    %1015 = vmatpush1.bf16.msra.mxu0 0
    %1016 = vmatprep.subr.bf16.mxu0 0
    %1017 = vmatpush1.bf16.msra.mxu0 0
    %1018 = vmatprep.subr.bf16.mxu0 0
    %1019 = vmatpush1.bf16.msra.mxu0 0
    %1020 = vmatprep.subr.bf16.mxu0 0
    %1021 = vmatpush1.bf16.msra.mxu0 0
    %1022 = vmatprep.subr.bf16.mxu0 0
    %1023 = vmatpush1.bf16.msra.mxu0 0
    %1024 = vmatprep.subr.bf16.mxu0 0
    %1025 = vmatpush1.bf16.msra.mxu0 0
    %1026 = vmatprep.subr.bf16.mxu0 0
    %1027 = vmatpush1.bf16.msra.mxu0 0
    %1028 = vmatprep.subr.bf16.mxu0 0
    %1029 = vmatpush1.bf16.msra.mxu0 0
    %1030 = vmatprep.subr.bf16.mxu0 0
    %1031 = vmatpush1.bf16.msra.mxu0 0
    %1032 = vmatprep.subr.bf16.mxu0 0
    %1033 = vmatpush1.bf16.msra.mxu0 0
    %1034 = vmatprep.subr.bf16.mxu0 0
    %1035 = vmatpush1.bf16.msra.mxu0 0
    %1036 = vmatprep.mubr.bf16.mxu0 0
    %1037 = vmatmul.mubr.bf16.gmra.mrb[0].mxu0 %v1002
    %v1038 = vpop.f32.mrb[0].mxu0
    %v1039 = vadd.f32 0.0, %v1038
    %v1040 = vpop.f32.mrb[0].mxu0
    %v1041 = vpop.f32.mrb[0].mxu0
    %v1042 = vpop.f32.mrb[0].mxu0
    %1043 = vdwg.mxu0
    %v1044 = vadd.f32 %v996, %v1039
    %v1045 = vxor.u32 %v1044, 2147483648
    %v1046 = vmul.f32 %v1045, 1.442695
    %v1047 = vpow.pop %v1046
    %v1048 = vadd.f32 %v1047, 1.0
    %v1049 = vrcp.pop %v1048
    %v1050 = vmul.f32 1.0, %v1049
    %v1051 = vtanh.pop %v1044
    %v1052 = vmul.f32 %v1050, %v875
    %1054 = vrot.lane.b32.xlu0 %v1051, 32
    %v1055 = vpop.permute.xlu0 %1054
    %v1057 = vmul.f32 %v1050, %v1055
    %1059 = vrot.lane.b32.xlu0 %v1057, 32
    %v1060 = vpop.permute.xlu0 %1059
    %v1062 = vadd.f32 %v1052, %v1060
    %v1063 = vtanh.pop %v1062
    %1065 = vrot.lane.b32.xlu0 %v1063, 32
    %v1066 = vpop.permute.xlu0 %1065
    %v1068 = vmul.f32 %v1050, %v1066
    %s1069 = scalar_lea.vmem [#allocation2], 10
    %v1070 = vld [vmem:[%s1069] sm:$0x3]
    %1071 = vmatprep.subr.bf16.mxu0 0
    %1072 = vmatpush1.bf16.msra.mxu0 %v96
    %1073 = vmatprep.subr.bf16.mxu0 0
    %1074 = vmatpush1.bf16.msra.mxu0 %v97
    %1075 = vmatprep.subr.bf16.mxu0 0
    %1076 = vmatpush1.bf16.msra.mxu0 0
    %1077 = vmatprep.subr.bf16.mxu0 0
    %1078 = vmatpush1.bf16.msra.mxu0 0
    %1079 = vmatprep.subr.bf16.mxu0 0
    %1080 = vmatpush1.bf16.msra.mxu0 0
    %1081 = vmatprep.subr.bf16.mxu0 0
    %1082 = vmatpush1.bf16.msra.mxu0 0
    %1083 = vmatprep.subr.bf16.mxu0 0
    %1084 = vmatpush1.bf16.msra.mxu0 0
    %1085 = vmatprep.subr.bf16.mxu0 0
    %1086 = vmatpush1.bf16.msra.mxu0 0
    %1087 = vmatprep.subr.bf16.mxu0 0
    %1088 = vmatpush1.bf16.msra.mxu0 0
    %1089 = vmatprep.subr.bf16.mxu0 0
    %1090 = vmatpush1.bf16.msra.mxu0 0
    %1091 = vmatprep.subr.bf16.mxu0 0
    %1092 = vmatpush1.bf16.msra.mxu0 0
    %1093 = vmatprep.subr.bf16.mxu0 0
    %1094 = vmatpush1.bf16.msra.mxu0 0
    %1095 = vmatprep.subr.bf16.mxu0 0
    %1096 = vmatpush1.bf16.msra.mxu0 0
    %1097 = vmatprep.subr.bf16.mxu0 0
    %1098 = vmatpush1.bf16.msra.mxu0 0
    %1099 = vmatprep.subr.bf16.mxu0 0
    %1100 = vmatpush1.bf16.msra.mxu0 0
    %1101 = vmatprep.subr.bf16.mxu0 0
    %1102 = vmatpush1.bf16.msra.mxu0 0
    %1103 = vmatprep.mubr.bf16.mxu0 0
    %1104 = vmatmul.mubr.bf16.gmra.mrb[0].mxu0 %v954
    %v1105 = vpop.f32.mrb[0].mxu0
    %v1106 = vadd.f32 0.0, %v1105
    %v1107 = vpop.f32.mrb[0].mxu0
    %v1108 = vpop.f32.mrb[0].mxu0
    %v1109 = vpop.f32.mrb[0].mxu0
    %1110 = vdwg.mxu0
    %v1111 = vadd.f32 %v1070, %v1106
    %v1112 = vxor.u32 %v1111, 2147483648
    %v1113 = vmul.f32 %v1112, 1.442695
    %v1114 = vpow.pop %v1113
    %v1115 = vadd.f32 %v1114, 1.0
    %v1116 = vrcp.pop %v1115
    %v1117 = vmul.f32 1.0, %v1116
    %v1118 = vtanh.pop %v1111
    %v1119 = vmul.f32 %v1117, %v942
    %1121 = vrot.lane.b32.xlu0 %v1118, 32
    %v1122 = vpop.permute.xlu0 %1121
    %v1124 = vmul.f32 %v1117, %v1122
    %1126 = vrot.lane.b32.xlu0 %v1124, 32
    %v1127 = vpop.permute.xlu0 %1126
    %v1129 = vadd.f32 %v1119, %v1127
    %v1130 = vtanh.pop %v1129
    %1132 = vrot.lane.b32.xlu0 %v1130, 32
    %v1133 = vpop.permute.xlu0 %1132
    %v1135 = vmul.f32 %v1117, %v1133
    %v1136 = vpack.c.bf16 %v1135, %v1135
    %1138 = vrot.lane.b32.xlu0 %v1136, 64
    %v1139 = vpop.permute.xlu0 %1138
    %v1141 = vsel %vm100, %v1139, 0
    %1143 = vmatprep.subr.bf16.mxu0 0
    %1144 = vmatpush1.bf16.msra.mxu0 %v186
    %1145 = vmatprep.subr.bf16.mxu0 0
    %1146 = vmatpush1.bf16.msra.mxu0 %v187
    %1147 = vmatprep.subr.bf16.mxu0 0
    %1148 = vmatpush1.bf16.msra.mxu0 0
    %1149 = vmatprep.subr.bf16.mxu0 0
    %1150 = vmatpush1.bf16.msra.mxu0 0
    %1151 = vmatprep.subr.bf16.mxu0 0
    %1152 = vmatpush1.bf16.msra.mxu0 0
    %1153 = vmatprep.subr.bf16.mxu0 0
    %1154 = vmatpush1.bf16.msra.mxu0 0
    %1155 = vmatprep.subr.bf16.mxu0 0
    %1156 = vmatpush1.bf16.msra.mxu0 0
    %1157 = vmatprep.subr.bf16.mxu0 0
    %1158 = vmatpush1.bf16.msra.mxu0 0
    %1159 = vmatprep.subr.bf16.mxu0 0
    %1160 = vmatpush1.bf16.msra.mxu0 0
    %1161 = vmatprep.subr.bf16.mxu0 0
    %1162 = vmatpush1.bf16.msra.mxu0 0
    %1163 = vmatprep.subr.bf16.mxu0 0
    %1164 = vmatpush1.bf16.msra.mxu0 0
    %1165 = vmatprep.subr.bf16.mxu0 0
    %1166 = vmatpush1.bf16.msra.mxu0 0
    %1167 = vmatprep.subr.bf16.mxu0 0
    %1168 = vmatpush1.bf16.msra.mxu0 0
    %1169 = vmatprep.subr.bf16.mxu0 0
    %1170 = vmatpush1.bf16.msra.mxu0 0
    %1171 = vmatprep.subr.bf16.mxu0 0
    %1172 = vmatpush1.bf16.msra.mxu0 0
    %1173 = vmatprep.subr.bf16.mxu0 0
    %1174 = vmatpush1.bf16.msra.mxu0 0
    %1175 = vmatprep.mubr.bf16.mxu0 0
    %1176 = vmatmul.mubr.bf16.gmra.mrb[0].mxu0 %v1141
    %v1177 = vpop.f32.mrb[0].mxu0
    %v1178 = vadd.f32 0.0, %v1177
    %v1179 = vpop.f32.mrb[0].mxu0
    %v1180 = vpop.f32.mrb[0].mxu0
    %v1181 = vpop.f32.mrb[0].mxu0
    %1182 = vdwg.mxu0
    %v1183 = vadd.f32 %v237, %v1178
    %v1184 = vpack.c.bf16 %v1068, %v1068
    %1186 = vrot.lane.b32.xlu0 %v1184, 64
    %v1187 = vpop.permute.xlu0 %1186
    %v1189 = vsel %vm100, %v1187, 0
    %1191 = vmatprep.subr.bf16.mxu0 0
    %1192 = vmatpush1.bf16.msra.mxu0 %v252
    %1193 = vmatprep.subr.bf16.mxu0 0
    %1194 = vmatpush1.bf16.msra.mxu0 %v253
    %1195 = vmatprep.subr.bf16.mxu0 0
    %1196 = vmatpush1.bf16.msra.mxu0 0
    %1197 = vmatprep.subr.bf16.mxu0 0
    %1198 = vmatpush1.bf16.msra.mxu0 0
    %1199 = vmatprep.subr.bf16.mxu0 0
    %1200 = vmatpush1.bf16.msra.mxu0 0
    %1201 = vmatprep.subr.bf16.mxu0 0
    %1202 = vmatpush1.bf16.msra.mxu0 0
    %1203 = vmatprep.subr.bf16.mxu0 0
    %1204 = vmatpush1.bf16.msra.mxu0 0
    %1205 = vmatprep.subr.bf16.mxu0 0
    %1206 = vmatpush1.bf16.msra.mxu0 0
    %1207 = vmatprep.subr.bf16.mxu0 0
    %1208 = vmatpush1.bf16.msra.mxu0 0
    %1209 = vmatprep.subr.bf16.mxu0 0
    %1210 = vmatpush1.bf16.msra.mxu0 0
    %1211 = vmatprep.subr.bf16.mxu0 0
    %1212 = vmatpush1.bf16.msra.mxu0 0
    %1213 = vmatprep.subr.bf16.mxu0 0
    %1214 = vmatpush1.bf16.msra.mxu0 0
    %1215 = vmatprep.subr.bf16.mxu0 0
    %1216 = vmatpush1.bf16.msra.mxu0 0
    %1217 = vmatprep.subr.bf16.mxu0 0
    %1218 = vmatpush1.bf16.msra.mxu0 0
    %1219 = vmatprep.subr.bf16.mxu0 0
    %1220 = vmatpush1.bf16.msra.mxu0 0
    %1221 = vmatprep.subr.bf16.mxu0 0
    %1222 = vmatpush1.bf16.msra.mxu0 0
    %1223 = vmatprep.mubr.bf16.mxu0 0
    %1224 = vmatmul.mubr.bf16.gmra.mrb[0].mxu0 %v1189
    %v1225 = vpop.f32.mrb[0].mxu0
    %v1226 = vadd.f32 0.0, %v1225
    %v1227 = vpop.f32.mrb[0].mxu0
    %v1228 = vpop.f32.mrb[0].mxu0
    %v1229 = vpop.f32.mrb[0].mxu0
    %1230 = vdwg.mxu0
    %v1231 = vadd.f32 %v1183, %v1226
    %v1232 = vxor.u32 %v1231, 2147483648
    %v1233 = vmul.f32 %v1232, 1.442695
    %v1234 = vpow.pop %v1233
    %v1235 = vadd.f32 %v1234, 1.0
    %v1236 = vrcp.pop %v1235
    %v1237 = vmul.f32 1.0, %v1236
    %v1238 = vtanh.pop %v1231
    %v1239 = vmul.f32 %v1237, %v1062
    %1241 = vrot.lane.b32.xlu0 %v1238, 32
    %v1242 = vpop.permute.xlu0 %1241
    %v1244 = vmul.f32 %v1237, %v1242
    %1246 = vrot.lane.b32.xlu0 %v1244, 32
    %v1247 = vpop.permute.xlu0 %1246
    %v1249 = vadd.f32 %v1239, %v1247
    %v1250 = vtanh.pop %v1249
    %1252 = vrot.lane.b32.xlu0 %v1250, 32
    %v1253 = vpop.permute.xlu0 %1252
    %v1255 = vmul.f32 %v1237, %v1253
    %s1256 = scalar_lea.vmem [#allocation2], 12
    %v1257 = vld [vmem:[%s1256] sm:$0x3]
    %1258 = vmatprep.subr.bf16.mxu0 0
    %1259 = vmatpush1.bf16.msra.mxu0 %v96
    %1260 = vmatprep.subr.bf16.mxu0 0
    %1261 = vmatpush1.bf16.msra.mxu0 %v97
    %1262 = vmatprep.subr.bf16.mxu0 0
    %1263 = vmatpush1.bf16.msra.mxu0 0
    %1264 = vmatprep.subr.bf16.mxu0 0
    %1265 = vmatpush1.bf16.msra.mxu0 0
    %1266 = vmatprep.subr.bf16.mxu0 0
    %1267 = vmatpush1.bf16.msra.mxu0 0
    %1268 = vmatprep.subr.bf16.mxu0 0
    %1269 = vmatpush1.bf16.msra.mxu0 0
    %1270 = vmatprep.subr.bf16.mxu0 0
    %1271 = vmatpush1.bf16.msra.mxu0 0
    %1272 = vmatprep.subr.bf16.mxu0 0
    %1273 = vmatpush1.bf16.msra.mxu0 0
    %1274 = vmatprep.subr.bf16.mxu0 0
    %1275 = vmatpush1.bf16.msra.mxu0 0
    %1276 = vmatprep.subr.bf16.mxu0 0
    %1277 = vmatpush1.bf16.msra.mxu0 0
    %1278 = vmatprep.subr.bf16.mxu0 0
    %1279 = vmatpush1.bf16.msra.mxu0 0
    %1280 = vmatprep.subr.bf16.mxu0 0
    %1281 = vmatpush1.bf16.msra.mxu0 0
    %1282 = vmatprep.subr.bf16.mxu0 0
    %1283 = vmatpush1.bf16.msra.mxu0 0
    %1284 = vmatprep.subr.bf16.mxu0 0
    %1285 = vmatpush1.bf16.msra.mxu0 0
    %1286 = vmatprep.subr.bf16.mxu0 0
    %1287 = vmatpush1.bf16.msra.mxu0 0
    %1288 = vmatprep.subr.bf16.mxu0 0
    %1289 = vmatpush1.bf16.msra.mxu0 0
    %1290 = vmatprep.mubr.bf16.mxu0 0
    %1291 = vmatmul.mubr.bf16.gmra.mrb[0].mxu0 %v1141
    %v1292 = vpop.f32.mrb[0].mxu0
    %v1293 = vadd.f32 0.0, %v1292
    %v1294 = vpop.f32.mrb[0].mxu0
    %v1295 = vpop.f32.mrb[0].mxu0
    %v1296 = vpop.f32.mrb[0].mxu0
    %1297 = vdwg.mxu0
    %v1298 = vadd.f32 %v1257, %v1293
    %v1299 = vxor.u32 %v1298, 2147483648
    %v1300 = vmul.f32 %v1299, 1.442695
    %v1301 = vpow.pop %v1300
    %v1302 = vadd.f32 %v1301, 1.0
    %v1303 = vrcp.pop %v1302
    %v1304 = vmul.f32 1.0, %v1303
    %v1305 = vtanh.pop %v1298
    %v1306 = vmul.f32 %v1304, %v1129
    %1308 = vrot.lane.b32.xlu0 %v1305, 32
    %v1309 = vpop.permute.xlu0 %1308
    %v1311 = vmul.f32 %v1304, %v1309
    %1313 = vrot.lane.b32.xlu0 %v1311, 32
    %v1314 = vpop.permute.xlu0 %1313
    %v1316 = vadd.f32 %v1306, %v1314
    %v1317 = vtanh.pop %v1316
    %1319 = vrot.lane.b32.xlu0 %v1317, 32
    %v1320 = vpop.permute.xlu0 %1319
    %v1322 = vmul.f32 %v1304, %v1320
    %v1323 = vpack.c.bf16 %v1322, %v1322
    %1325 = vrot.lane.b32.xlu0 %v1323, 64
    %v1326 = vpop.permute.xlu0 %1325
    %v1328 = vsel %vm100, %v1326, 0
    %1330 = vmatprep.subr.bf16.mxu0 0
    %1331 = vmatpush1.bf16.msra.mxu0 %v186
    %1332 = vmatprep.subr.bf16.mxu0 0
    %1333 = vmatpush1.bf16.msra.mxu0 %v187
    %1334 = vmatprep.subr.bf16.mxu0 0
    %1335 = vmatpush1.bf16.msra.mxu0 0
    %1336 = vmatprep.subr.bf16.mxu0 0
    %1337 = vmatpush1.bf16.msra.mxu0 0
    %1338 = vmatprep.subr.bf16.mxu0 0
    %1339 = vmatpush1.bf16.msra.mxu0 0
    %1340 = vmatprep.subr.bf16.mxu0 0
    %1341 = vmatpush1.bf16.msra.mxu0 0
    %1342 = vmatprep.subr.bf16.mxu0 0
    %1343 = vmatpush1.bf16.msra.mxu0 0
    %1344 = vmatprep.subr.bf16.mxu0 0
    %1345 = vmatpush1.bf16.msra.mxu0 0
    %1346 = vmatprep.subr.bf16.mxu0 0
    %1347 = vmatpush1.bf16.msra.mxu0 0
    %1348 = vmatprep.subr.bf16.mxu0 0
    %1349 = vmatpush1.bf16.msra.mxu0 0
    %1350 = vmatprep.subr.bf16.mxu0 0
    %1351 = vmatpush1.bf16.msra.mxu0 0
    %1352 = vmatprep.subr.bf16.mxu0 0
    %1353 = vmatpush1.bf16.msra.mxu0 0
    %1354 = vmatprep.subr.bf16.mxu0 0
    %1355 = vmatpush1.bf16.msra.mxu0 0
    %1356 = vmatprep.subr.bf16.mxu0 0
    %1357 = vmatpush1.bf16.msra.mxu0 0
    %1358 = vmatprep.subr.bf16.mxu0 0
    %1359 = vmatpush1.bf16.msra.mxu0 0
    %1360 = vmatprep.subr.bf16.mxu0 0
    %1361 = vmatpush1.bf16.msra.mxu0 0
    %1362 = vmatprep.mubr.bf16.mxu0 0
    %1363 = vmatmul.mubr.bf16.gmra.mrb[0].mxu0 %v1328
    %v1364 = vpop.f32.mrb[0].mxu0
    %v1365 = vadd.f32 0.0, %v1364
    %v1366 = vpop.f32.mrb[0].mxu0
    %v1367 = vpop.f32.mrb[0].mxu0
    %v1368 = vpop.f32.mrb[0].mxu0
    %1369 = vdwg.mxu0
    %v1370 = vadd.f32 %v237, %v1365
    %v1371 = vpack.c.bf16 %v1255, %v1255
    %1373 = vrot.lane.b32.xlu0 %v1371, 64
    %v1374 = vpop.permute.xlu0 %1373
    %v1376 = vsel %vm100, %v1374, 0
    %1378 = vmatprep.subr.bf16.mxu0 0
    %1379 = vmatpush1.bf16.msra.mxu0 %v252
    %1380 = vmatprep.subr.bf16.mxu0 0
    %1381 = vmatpush1.bf16.msra.mxu0 %v253
    %1382 = vmatprep.subr.bf16.mxu0 0
    %1383 = vmatpush1.bf16.msra.mxu0 0
    %1384 = vmatprep.subr.bf16.mxu0 0
    %1385 = vmatpush1.bf16.msra.mxu0 0
    %1386 = vmatprep.subr.bf16.mxu0 0
    %1387 = vmatpush1.bf16.msra.mxu0 0
    %1388 = vmatprep.subr.bf16.mxu0 0
    %1389 = vmatpush1.bf16.msra.mxu0 0
    %1390 = vmatprep.subr.bf16.mxu0 0
    %1391 = vmatpush1.bf16.msra.mxu0 0
    %1392 = vmatprep.subr.bf16.mxu0 0
    %1393 = vmatpush1.bf16.msra.mxu0 0
    %1394 = vmatprep.subr.bf16.mxu0 0
    %1395 = vmatpush1.bf16.msra.mxu0 0
    %1396 = vmatprep.subr.bf16.mxu0 0
    %1397 = vmatpush1.bf16.msra.mxu0 0
    %1398 = vmatprep.subr.bf16.mxu0 0
    %1399 = vmatpush1.bf16.msra.mxu0 0
    %1400 = vmatprep.subr.bf16.mxu0 0
    %1401 = vmatpush1.bf16.msra.mxu0 0
    %1402 = vmatprep.subr.bf16.mxu0 0
    %1403 = vmatpush1.bf16.msra.mxu0 0
    %1404 = vmatprep.subr.bf16.mxu0 0
    %1405 = vmatpush1.bf16.msra.mxu0 0
    %1406 = vmatprep.subr.bf16.mxu0 0
    %1407 = vmatpush1.bf16.msra.mxu0 0
    %1408 = vmatprep.subr.bf16.mxu0 0
    %1409 = vmatpush1.bf16.msra.mxu0 0
    %1410 = vmatprep.mubr.bf16.mxu0 0
    %1411 = vmatmul.mubr.bf16.gmra.mrb[0].mxu0 %v1376
    %v1412 = vpop.f32.mrb[0].mxu0
    %v1413 = vadd.f32 0.0, %v1412
    %v1414 = vpop.f32.mrb[0].mxu0
    %v1415 = vpop.f32.mrb[0].mxu0
    %v1416 = vpop.f32.mrb[0].mxu0
    %1417 = vdwg.mxu0
    %v1418 = vadd.f32 %v1370, %v1413
    %v1419 = vxor.u32 %v1418, 2147483648
    %v1420 = vmul.f32 %v1419, 1.442695
    %v1421 = vpow.pop %v1420
    %v1422 = vadd.f32 %v1421, 1.0
    %v1423 = vrcp.pop %v1422
    %v1424 = vmul.f32 1.0, %v1423
    %v1425 = vtanh.pop %v1418
    %v1426 = vmul.f32 %v1424, %v1249
    %1428 = vrot.lane.b32.xlu0 %v1425, 32
    %v1429 = vpop.permute.xlu0 %1428
    %v1431 = vmul.f32 %v1424, %v1429
    %1433 = vrot.lane.b32.xlu0 %v1431, 32
    %v1434 = vpop.permute.xlu0 %1433
    %v1436 = vadd.f32 %v1426, %v1434
    %v1437 = vtanh.pop %v1436
    %1439 = vrot.lane.b32.xlu0 %v1437, 32
    %v1440 = vpop.permute.xlu0 %1439
    %v1442 = vmul.f32 %v1424, %v1440
    %s1443 = scalar_lea.vmem [#allocation2], 14
    %v1444 = vld [vmem:[%s1443] sm:$0x3]
    %1445 = vmatprep.subr.bf16.mxu0 0
    %1446 = vmatpush1.bf16.msra.mxu0 %v96
    %1447 = vmatprep.subr.bf16.mxu0 0
    %1448 = vmatpush1.bf16.msra.mxu0 %v97
    %1449 = vmatprep.subr.bf16.mxu0 0
    %1450 = vmatpush1.bf16.msra.mxu0 0
    %1451 = vmatprep.subr.bf16.mxu0 0
    %1452 = vmatpush1.bf16.msra.mxu0 0
    %1453 = vmatprep.subr.bf16.mxu0 0
    %1454 = vmatpush1.bf16.msra.mxu0 0
    %1455 = vmatprep.subr.bf16.mxu0 0
    %1456 = vmatpush1.bf16.msra.mxu0 0
    %1457 = vmatprep.subr.bf16.mxu0 0
    %1458 = vmatpush1.bf16.msra.mxu0 0
    %1459 = vmatprep.subr.bf16.mxu0 0
    %1460 = vmatpush1.bf16.msra.mxu0 0
    %1461 = vmatprep.subr.bf16.mxu0 0
    %1462 = vmatpush1.bf16.msra.mxu0 0
    %1463 = vmatprep.subr.bf16.mxu0 0
    %1464 = vmatpush1.bf16.msra.mxu0 0
    %1465 = vmatprep.subr.bf16.mxu0 0
    %1466 = vmatpush1.bf16.msra.mxu0 0
    %1467 = vmatprep.subr.bf16.mxu0 0
    %1468 = vmatpush1.bf16.msra.mxu0 0
    %1469 = vmatprep.subr.bf16.mxu0 0
    %1470 = vmatpush1.bf16.msra.mxu0 0
    %1471 = vmatprep.subr.bf16.mxu0 0
    %1472 = vmatpush1.bf16.msra.mxu0 0
    %1473 = vmatprep.subr.bf16.mxu0 0
    %1474 = vmatpush1.bf16.msra.mxu0 0
    %1475 = vmatprep.subr.bf16.mxu0 0
    %1476 = vmatpush1.bf16.msra.mxu0 0
    %1477 = vmatprep.mubr.bf16.mxu0 0
    %1478 = vmatmul.mubr.bf16.gmra.mrb[0].mxu0 %v1328
    %v1479 = vpop.f32.mrb[0].mxu0
    %v1480 = vadd.f32 0.0, %v1479
    %v1481 = vpop.f32.mrb[0].mxu0
    %v1482 = vpop.f32.mrb[0].mxu0
    %v1483 = vpop.f32.mrb[0].mxu0
    %1484 = vdwg.mxu0
    %v1485 = vadd.f32 %v1444, %v1480
    %v1486 = vxor.u32 %v1485, 2147483648
    %v1487 = vmul.f32 %v1486, 1.442695
    %v1488 = vpow.pop %v1487
    %v1489 = vadd.f32 %v1488, 1.0
    %v1490 = vrcp.pop %v1489
    %v1491 = vmul.f32 1.0, %v1490
    %v1492 = vtanh.pop %v1485
    %v1493 = vmul.f32 %v1491, %v1316
    %1495 = vrot.lane.b32.xlu0 %v1492, 32
    %v1496 = vpop.permute.xlu0 %1495
    %v1498 = vmul.f32 %v1491, %v1496
    %1500 = vrot.lane.b32.xlu0 %v1498, 32
    %v1501 = vpop.permute.xlu0 %1500
    %v1503 = vadd.f32 %v1493, %v1501
    %v1504 = vtanh.pop %v1503
    %1506 = vrot.lane.b32.xlu0 %v1504, 32
    %v1507 = vpop.permute.xlu0 %1506
    %v1509 = vmul.f32 %v1491, %v1507
    %v1510 = vpack.c.bf16 %v1509, %v1509
    %1512 = vrot.lane.b32.xlu0 %v1510, 64
    %v1513 = vpop.permute.xlu0 %1512
    %v1515 = vsel %vm100, %v1513, 0
    %1517 = vmatprep.subr.bf16.mxu0 0
    %1518 = vmatpush1.bf16.msra.mxu0 %v186
    %1519 = vmatprep.subr.bf16.mxu0 0
    %1520 = vmatpush1.bf16.msra.mxu0 %v187
    %1521 = vmatprep.subr.bf16.mxu0 0
    %1522 = vmatpush1.bf16.msra.mxu0 0
    %1523 = vmatprep.subr.bf16.mxu0 0
    %1524 = vmatpush1.bf16.msra.mxu0 0
    %1525 = vmatprep.subr.bf16.mxu0 0
    %1526 = vmatpush1.bf16.msra.mxu0 0
    %1527 = vmatprep.subr.bf16.mxu0 0
    %1528 = vmatpush1.bf16.msra.mxu0 0
    %1529 = vmatprep.subr.bf16.mxu0 0
    %1530 = vmatpush1.bf16.msra.mxu0 0
    %1531 = vmatprep.subr.bf16.mxu0 0
    %1532 = vmatpush1.bf16.msra.mxu0 0
    %1533 = vmatprep.subr.bf16.mxu0 0
    %1534 = vmatpush1.bf16.msra.mxu0 0
    %1535 = vmatprep.subr.bf16.mxu0 0
    %1536 = vmatpush1.bf16.msra.mxu0 0
    %1537 = vmatprep.subr.bf16.mxu0 0
    %1538 = vmatpush1.bf16.msra.mxu0 0
    %1539 = vmatprep.subr.bf16.mxu0 0
    %1540 = vmatpush1.bf16.msra.mxu0 0
    %1541 = vmatprep.subr.bf16.mxu0 0
    %1542 = vmatpush1.bf16.msra.mxu0 0
    %1543 = vmatprep.subr.bf16.mxu0 0
    %1544 = vmatpush1.bf16.msra.mxu0 0
    %1545 = vmatprep.subr.bf16.mxu0 0
    %1546 = vmatpush1.bf16.msra.mxu0 0
    %1547 = vmatprep.subr.bf16.mxu0 0
    %1548 = vmatpush1.bf16.msra.mxu0 0
    %1549 = vmatprep.mubr.bf16.mxu0 0
    %1550 = vmatmul.mubr.bf16.gmra.mrb[0].mxu0 %v1515
    %v1551 = vpop.f32.mrb[0].mxu0
    %v1552 = vadd.f32 0.0, %v1551
    %v1553 = vpop.f32.mrb[0].mxu0
    %v1554 = vpop.f32.mrb[0].mxu0
    %v1555 = vpop.f32.mrb[0].mxu0
    %1556 = vdwg.mxu0
    %v1557 = vadd.f32 %v237, %v1552
    %v1558 = vpack.c.bf16 %v1442, %v1442
    %1560 = vrot.lane.b32.xlu0 %v1558, 64
    %v1561 = vpop.permute.xlu0 %1560
    %v1563 = vsel %vm100, %v1561, 0
    %1565 = vmatprep.subr.bf16.mxu0 0
    %1566 = vmatpush1.bf16.msra.mxu0 %v252
    %1567 = vmatprep.subr.bf16.mxu0 0
    %1568 = vmatpush1.bf16.msra.mxu0 %v253
    %1569 = vmatprep.subr.bf16.mxu0 0
    %1570 = vmatpush1.bf16.msra.mxu0 0
    %1571 = vmatprep.subr.bf16.mxu0 0
    %1572 = vmatpush1.bf16.msra.mxu0 0
    %1573 = vmatprep.subr.bf16.mxu0 0
    %1574 = vmatpush1.bf16.msra.mxu0 0
    %1575 = vmatprep.subr.bf16.mxu0 0
    %1576 = vmatpush1.bf16.msra.mxu0 0
    %1577 = vmatprep.subr.bf16.mxu0 0
    %1578 = vmatpush1.bf16.msra.mxu0 0
    %1579 = vmatprep.subr.bf16.mxu0 0
    %1580 = vmatpush1.bf16.msra.mxu0 0
    %1581 = vmatprep.subr.bf16.mxu0 0
    %1582 = vmatpush1.bf16.msra.mxu0 0
    %1583 = vmatprep.subr.bf16.mxu0 0
    %1584 = vmatpush1.bf16.msra.mxu0 0
    %1585 = vmatprep.subr.bf16.mxu0 0
    %1586 = vmatpush1.bf16.msra.mxu0 0
    %1587 = vmatprep.subr.bf16.mxu0 0
    %1588 = vmatpush1.bf16.msra.mxu0 0
    %1589 = vmatprep.subr.bf16.mxu0 0
    %1590 = vmatpush1.bf16.msra.mxu0 0
    %1591 = vmatprep.subr.bf16.mxu0 0
    %1592 = vmatpush1.bf16.msra.mxu0 0
    %1593 = vmatprep.subr.bf16.mxu0 0
    %1594 = vmatpush1.bf16.msra.mxu0 0
    %1595 = vmatprep.subr.bf16.mxu0 0
    %1596 = vmatpush1.bf16.msra.mxu0 0
    %1597 = vmatprep.mubr.bf16.mxu0 0
    %1598 = vmatmul.mubr.bf16.gmra.mrb[0].mxu0 %v1563
    %v1599 = vpop.f32.mrb[0].mxu0
    %v1600 = vadd.f32 0.0, %v1599
    %v1601 = vpop.f32.mrb[0].mxu0
    %v1602 = vpop.f32.mrb[0].mxu0
    %v1603 = vpop.f32.mrb[0].mxu0
    %1604 = vdwg.mxu0
    %v1605 = vadd.f32 %v1557, %v1600
    %v1606 = vxor.u32 %v1605, 2147483648
    %v1607 = vmul.f32 %v1606, 1.442695
    %v1608 = vpow.pop %v1607
    %v1609 = vadd.f32 %v1608, 1.0
    %v1610 = vrcp.pop %v1609
    %v1611 = vmul.f32 1.0, %v1610
    %v1612 = vtanh.pop %v1605
    %v1613 = vmul.f32 %v1611, %v1436
    %1615 = vrot.lane.b32.xlu0 %v1612, 32
    %v1616 = vpop.permute.xlu0 %1615
    %v1618 = vmul.f32 %v1611, %v1616
    %1620 = vrot.lane.b32.xlu0 %v1618, 32
    %v1621 = vpop.permute.xlu0 %1620
    %v1623 = vadd.f32 %v1613, %v1621
    %v1624 = vtanh.pop %v1623
    %1626 = vrot.lane.b32.xlu0 %v1624, 32
    %v1627 = vpop.permute.xlu0 %1626
    %v1629 = vmul.f32 %v1611, %v1627
    %v1630 = vpack.c.bf16 %v1629, %v1629
    %v1631 = vld [vmem:[%s5] sm:$0xf]
    %v1632 = vld [vmem:[%s5 + $0x4] sm:$0xf]
    %v1633 = vld [vmem:[%s5 + $0x8] sm:$0xf]
    %v1634 = vld [vmem:[%s5 + $0xc] sm:$0xf]
    %v1635 = vld [vmem:[%s6] sm:$0x1]
    %v1637 = vlaneseq
    %v1638 = vshrl.u32 %v1637, 7
    %v1639 = vsub.s32 0, %v1638
    %v1640 = vrot.slane %v1635, %v1639
    %1643 = vrot.lane.b32.xlu0 %v1630, 64
    %v1644 = vpop.permute.xlu0 %1643
    %v1649 = vunpack.c.l.b16 %v1631
    %v1650 = vunpack.c.l.b16 %v1632
    %v1651 = vunpack.c.l.b16 %v1633
    %v1652 = vunpack.c.l.b16 %v1634
    %v1653 = vpack.c.b16 %v1650, %v1649
    %v1654 = vpack.c.b16 %v1652, %v1651
    %v1658 = vsel %vm100, %v1644, 0
    %1660 = vmatprep.subr.bf16.mxu0 0
    %1661 = vmatpush1.bf16.msra.mxu0 %v1653
    %1662 = vmatprep.subr.bf16.mxu0 0
    %1663 = vmatpush1.bf16.msra.mxu0 %v1654
    %1664 = vmatprep.subr.bf16.mxu0 0
    %1665 = vmatpush1.bf16.msra.mxu0 0
    %1666 = vmatprep.subr.bf16.mxu0 0
    %1667 = vmatpush1.bf16.msra.mxu0 0
    %1668 = vmatprep.subr.bf16.mxu0 0
    %1669 = vmatpush1.bf16.msra.mxu0 0
    %1670 = vmatprep.subr.bf16.mxu0 0
    %1671 = vmatpush1.bf16.msra.mxu0 0
    %1672 = vmatprep.subr.bf16.mxu0 0
    %1673 = vmatpush1.bf16.msra.mxu0 0
    %1674 = vmatprep.subr.bf16.mxu0 0
    %1675 = vmatpush1.bf16.msra.mxu0 0
    %1676 = vmatprep.subr.bf16.mxu0 0
    %1677 = vmatpush1.bf16.msra.mxu0 0
    %1678 = vmatprep.subr.bf16.mxu0 0
    %1679 = vmatpush1.bf16.msra.mxu0 0
    %1680 = vmatprep.subr.bf16.mxu0 0
    %1681 = vmatpush1.bf16.msra.mxu0 0
    %1682 = vmatprep.subr.bf16.mxu0 0
    %1683 = vmatpush1.bf16.msra.mxu0 0
    %1684 = vmatprep.subr.bf16.mxu0 0
    %1685 = vmatpush1.bf16.msra.mxu0 0
    %1686 = vmatprep.subr.bf16.mxu0 0
    %1687 = vmatpush1.bf16.msra.mxu0 0
    %1688 = vmatprep.subr.bf16.mxu0 0
    %1689 = vmatpush1.bf16.msra.mxu0 0
    %1690 = vmatprep.subr.bf16.mxu0 0
    %1691 = vmatpush1.bf16.msra.mxu0 0
    %1692 = vmatprep.mubr.bf16.mxu0 0
    %1693 = vmatmul.mubr.bf16.gmra.mrb[0].mxu0 %v1658
    %v1694 = vpop.f32.mrb[0].mxu0
    %v1695 = vadd.f32 %v1640, %v1694
    %v1696 = vpop.f32.mrb[0].mxu0
    %v1697 = vpop.f32.mrb[0].mxu0
    %v1698 = vpop.f32.mrb[0].mxu0
    %1699 = vdwg.mxu0
    %vm1700 = vcmask 254976
    %1701 = vst.msk [vmem:[#allocation10] sm:$0x3] %vm1700, %v1695
    // Predicated region
    $region46: #{tpu_custom_call.1} parent=1 // pred_check
      _
    $region47: #{tpu_custom_call.1} parent=1 // pred_check_branch
      %1703 = sbr.rel (0) target = $region49
    $region48: #{tpu_custom_call.1} parent=1 // pred_region
      %s1705 = ssub.s32 32, 32
      %1706 = vsyncadd [#allocation4], %s1705
      %s1708 = sshll.u32 [#allocation10], 4
      %s1709 = int_to_ptr.vmem [resolvable:$true] %s1708
      %1711 = dma.vmem_to_hbm [thread:$0]  %s1709, 32, %s7, [#allocation4]
    $region49: #{tpu_custom_call.1} parent=1 // pred_fallthru
      _
    // Predicated region
    $region50: #{tpu_custom_call.1} parent=1 // pred_check
      _
    $region51: #{tpu_custom_call.1} parent=1 // pred_check_branch
      %1713 = sbr.rel (0) target = $region53
    $region52: #{tpu_custom_call.1} parent=1 // pred_region
      %1714 = dma.done [#allocation4], 32
    $region53: #{tpu_custom_call.1} parent=1 // pred_fallthru
      _
    %1715 = vsyncpa [#allocation3], 1
    %1716 = vsyncpa [#allocation6], 1
    %1717 = vsyncpa [#allocation9], 1
    %1718 = vsyncpa [#allocation4], 1

</llo_original>
